<compile_context>
chip_gen: v6e
topology: v6e:2x2x1
jax: 0.10.0
libtpu: 0.0.40
codegen_flags: <defaults>
</compile_context>

<pallas_src>
import jax
import jax.numpy as jnp
from jax import lax
from jax.experimental import pallas as pl
from jax.experimental.pallas import tpu as pltpu

EPS = 1e-5        # nn.BatchNorm2d default eps
KSIZE = 3         # kernel_size=3, padding=1


# ----------------------- weight pre-packing (wrapper side, one-time) -----------------------
def _banded_weight(w_hwio, W):
    """Fold the width taps (and 'same' width padding) of a 3x3 conv into a banded matrix.

    w_hwio : (3, 3, Ci, Co)  (HWIO)
    returns: (W*Ci, 3*W*Co) where tap kh occupies output-lane block kh and
             B[kh][wi*Ci+ci, wo*Co+co] = w[kh, wi-wo+1, ci, co]  (zero outside the band).
    """
    kh, kw, ci, co = w_hwio.shape
    # E[k, wi, wo] = 1 iff wi == wo + k - 1  (offset identities; the borders give padding=0)
    eyes = jnp.stack([jnp.eye(W, k=1 - k, dtype=w_hwio.dtype) for k in range(kw)])
    b = jnp.einsum("kab,hkio->haibo", eyes, w_hwio,
                   precision=lax.Precision.HIGHEST)              # (kh, W, Ci, W, Co)
    b = b.reshape(kh, W * ci, W * co)
    return jnp.transpose(b, (1, 0, 2)).reshape(W * ci, kh * W * co)


# ------------------------------------ in-kernel helpers ------------------------------------
def _shift_mats(rows, img_h, dtype):
    """S_up @ p -> p shifted down one row (row h <- row h-1); S_dn the opposite.
    Entries that would couple different images (height 'same' padding) are zeroed.
    Built from 2-D iotas + compares only, so lowering is trivial and the work stays on MXU."""
    r = lax.broadcasted_iota(jnp.int32, (rows, rows), 0)
    c = lax.broadcasted_iota(jnp.int32, (rows, rows), 1)
    up = (r - c) == 1
    dn = (c - r) == 1
    for k in range(img_h, rows, img_h):          # static unroll over image boundaries
        up = up & (r != k)
        dn = dn & (c != k)
    return up.astype(dtype), dn.astype(dtype)


def _conv3x3(x_rows, banded_ref, img_h):
    """3x3 'same' conv on a lane-dense (rows, W*Ci) buffer -> (rows, W*Co).

    One big matmul produces the three height taps as three lane blocks; two tiny
    shift-matmuls align the kh=0 / kh=2 taps."""
    rows = x_rows.shape[0]
    p = jnp.dot(x_rows, banded_ref[...], preferred_element_type=jnp.float32)
    wco = p.shape[1] // 3
    p0 = p[:, :wco]
    p1 = p[:, wco:2 * wco]
    p2 = p[:, 2 * wco:]
    s_up, s_dn = _shift_mats(rows, img_h, p.dtype)
    # out[h] = p0[h-1] + p1[h] + p2[h+1]
    return (p1
            + jnp.dot(s_up, p0, preferred_element_type=jnp.float32)
            + jnp.dot(s_dn, p2, preferred_element_type=jnp.float32))


def _channel_maps(W, cout, dtype):
    """0/1 matrices that reduce lanes -> channels and broadcast channels -> lanes
    for the (rows, W*Cout) lane-dense layout (avoids in-kernel lane reshapes)."""
    wco = W * cout
    r = lax.broadcasted_iota(jnp.int32, (wco, cout), 0)
    c = lax.broadcasted_iota(jnp.int32, (wco, cout), 1)
    gather = ((r % cout) == c).astype(dtype)     # (W*Co, Co)
    rt = lax.broadcasted_iota(jnp.int32, (cout, wco), 0)
    ct = lax.broadcasted_iota(jnp.int32, (cout, wco), 1)
    spread = ((ct % cout) == rt).astype(dtype)   # (Co, W*Co)
    return gather, spread


def _bn_relu(x, gamma_l, beta_l, gather, spread, inv_count):
    """Training-mode BatchNorm (batch statistics, biased variance, eps=1e-5) + ReLU on a
    lane-dense (rows, W*Co) buffer.  Per-channel reductions go through tiny matmuls."""
    row_sum = jnp.sum(x, axis=0, keepdims=True)                                 # (1, W*Co)
    mean_c = jnp.dot(row_sum, gather, preferred_element_type=jnp.float32) * inv_count
    mean_l = jnp.dot(mean_c, spread, preferred_element_type=jnp.float32)        # (1, W*Co)
    centered = x - mean_l
    sq_sum = jnp.sum(centered * centered, axis=0, keepdims=True)
    var_c = jnp.dot(sq_sum, gather, preferred_element_type=jnp.float32) * inv_count
    inv_std_l = jnp.dot(lax.rsqrt(var_c + EPS), spread,
                        preferred_element_type=jnp.float32)
    return jnp.maximum(centered * (inv_std_l * gamma_l) + beta_l, 0.0)


def _make_kernel(N, H, W, cin, cout):
    inv_count = 1.0 / float(N * H * W)

    def kernel(x_ref, b1_ref, b2_ref, aff_ref, o_ref, c1_ref):
        n = pl.program_id(0)

        # ---- every grid step: layer-1 conv for image n into the resident VMEM scratch ----
        start = n * H
        if H % 8 == 0:
            start = pl.multiple_of(start, 8)
        c1_ref[pl.ds(start, H), :] = _conv3x3(x_ref[0], b1_ref, H)

        # ---- last step: global BN1+ReLU, layer-2 conv, global BN2+ReLU, store output ----
        @pl.when(n == N - 1)
        def _finalize():
            gather, spread = _channel_maps(W, cout, jnp.float32)
            a1 = _bn_relu(c1_ref[...], aff_ref[0:1, :], aff_ref[1:2, :],
                          gather, spread, inv_count)
            c2 = _conv3x3(a1, b2_ref, H)
            o_ref[...] = _bn_relu(c2, aff_ref[2:3, :], aff_ref[3:4, :],
                                  gather, spread, inv_count)

    return kernel


# ------------------------------------------ wrapper ------------------------------------------
def local_feature_enhancement(x_nchw, params):
    """Forward pass of LocalFeatureEnhancement.  x_nchw: (N, Cin, H, W) -> (N, Cout, H, W)."""
    N, cin, H, W = x_nchw.shape
    cout = params["w1"].shape[-1]
    wci, wco = W * cin, W * cout

    # NCHW -> NHWC -> lane-dense (N, H, W*Cin).  (Boundary glue required by the NCHW API.)
    x2d = jnp.transpose(x_nchw, (0, 2, 3, 1)).astype(jnp.float32).reshape(N, H, wci)

    # Weight pre-packing (would be done once at load time in a real deployment).
    b1 = _banded_weight(params["w1"].astype(jnp.float32), W)        # (W*Cin,  3*W*Cout)
    b2 = _banded_weight(params["w2"].astype(jnp.float32), W)        # (W*Cout, 3*W*Cout)
    # BN affine params tiled to the lane-dense layout.  Conv biases are NOT passed to the
    # kernel: a per-channel constant shift cancels exactly under training-mode BatchNorm.
    aff = jnp.stack([jnp.tile(params["g1"].astype(jnp.float32), W),
                     jnp.tile(params["beta1"].astype(jnp.float32), W),
                     jnp.tile(params["g2"].astype(jnp.float32), W),
                     jnp.tile(params["beta2"].astype(jnp.float32), W)], axis=0)  # (4, W*Cout)

    out2d = pl.pallas_call(
        _make_kernel(N, H, W, cin, cout),
        out_shape=jax.ShapeDtypeStruct((N * H, wco), jnp.float32),
        grid=(N,),
        in_specs=[
            pl.BlockSpec((1, H, wci), lambda n: (n, 0, 0)),         # streamed per image
            pl.BlockSpec((wci, 3 * wco), lambda n: (0, 0)),         # resident weights
            pl.BlockSpec((wco, 3 * wco), lambda n: (0, 0)),
            pl.BlockSpec((4, wco), lambda n: (0, 0)),
        ],
        out_specs=pl.BlockSpec((N * H, wco), lambda n: (0, 0)),     # resident, written once
        scratch_shapes=[pltpu.VMEM((N * H, wco), jnp.float32)],     # layer-1 conv output
        compiler_params=pltpu.CompilerParams(
            dimension_semantics=("arbitrary",)),   # global BN statistics -> sequential grid
    )(x2d, b1, b2, aff)

    return jnp.transpose(out2d.reshape(N, H, W, cout), (0, 3, 1, 2))


# ----------------------------- pure-JAX reference (for checking) -----------------------------
def _ref_block(x_nhwc, w_hwio, bias, gamma, beta):
    y = lax.conv_general_dilated(
        x_nhwc, w_hwio, window_strides=(1, 1), padding=((1, 1), (1, 1)),
        dimension_numbers=("NHWC", "HWIO", "NHWC"), precision=lax.Precision.HIGHEST)
    y = y + bias.reshape(1, 1, 1, -1)
    mean = jnp.mean(y, axis=(0, 1, 2), keepdims=True)
    var = jnp.mean((y - mean) ** 2, axis=(0, 1, 2), keepdims=True)
    y = (y - mean) * lax.rsqrt(var + EPS) * gamma.reshape(1, 1, 1, -1) \
        + beta.reshape(1, 1, 1, -1)
    return jnp.maximum(y, 0.0)


def _ref_forward(x_nchw, p):
    x = jnp.transpose(x_nchw, (0, 2, 3, 1)).astype(jnp.float32)
    x = _ref_block(x, p["w1"], p["b1"], p["g1"], p["beta1"])
    x = _ref_block(x, p["w2"], p["b2"], p["g2"], p["beta2"])
    return jnp.transpose(x, (0, 3, 1, 2))


if __name__ == "__main__":
    N, Cin, Cout, H, W = 2, 4, 8, 16, 16

    key = jax.random.PRNGKey(0)
    kx, kw1, kb1, kw2, kb2 = jax.random.split(key, 5)

    x = jax.random.normal(kx, (N, Cin, H, W), jnp.float32)          # NCHW like PyTorch

    # PyTorch OIHW weights -> HWIO; BN gamma/beta at default init (1, 0).
    w1_oihw = jax.random.normal(kw1, (Cout, Cin, KSIZE, KSIZE), jnp.float32) * 0.1
    w2_oihw = jax.random.normal(kw2, (Cout, Cout, KSIZE, KSIZE), jnp.float32) * 0.1
    params = {
        "w1": jnp.transpose(w1_oihw, (2, 3, 1, 0)),                 # (3,3,Cin,Cout)
        "b1": jax.random.normal(kb1, (Cout,), jnp.float32) * 0.1,   # used by reference only
        "g1": jnp.ones((Cout,), jnp.float32),
        "beta1": jnp.zeros((Cout,), jnp.float32),
        "w2": jnp.transpose(w2_oihw, (2, 3, 1, 0)),                 # (3,3,Cout,Cout)
        "b2": jax.random.normal(kb2, (Cout,), jnp.float32) * 0.1,   # used by reference only
        "g2": jnp.ones((Cout,), jnp.float32),
        "beta2": jnp.zeros((Cout,), jnp.float32),
    }

    out = jax.jit(local_feature_enhancement)(x, params)
    out = jax.block_until_ready(out)

    ref = _ref_forward(x, params)
    assert out.shape == (N, Cout, H, W), out.shape
    max_err = float(jnp.max(jnp.abs(out - ref)))
    assert jnp.allclose(out, ref, atol=1e-4, rtol=1e-4), max_err

    print("KERNEL_OK")
</pallas_src>

<mosaic_0001>
module attributes {stable_mosaic.version = 11 : i64} {
  func.func @kernel(%arg0: i32, %arg1: memref<1x16x64xf32, #tpu.memory_space<vmem>>, %arg2: memref<64x384xf32, #tpu.memory_space<vmem>>, %arg3: memref<128x384xf32, #tpu.memory_space<vmem>>, %arg4: memref<4x128xf32, #tpu.memory_space<vmem>>, %arg5: memref<32x128xf32, #tpu.memory_space<vmem>>, %arg6: memref<32x128xf32, #tpu.memory_space<vmem>>) attributes {dimension_semantics = [#tpu.dimension_semantics<arbitrary>], iteration_bounds = array<i64: 2>, scalar_prefetch = 0 : i64, scratch_operands = 1 : i64, tpu.core_type = #tpu.core_type<tc>, window_params = [{transform_indices = @transform_0, window_bounds = array<i64: 1, 16, 64>}, {pipeline_mode = #tpu.pipeline_mode<synchronous>, transform_indices = @transform_1, window_bounds = array<i64: 64, 384>}, {pipeline_mode = #tpu.pipeline_mode<synchronous>, transform_indices = @transform_2, window_bounds = array<i64: 128, 384>}, {pipeline_mode = #tpu.pipeline_mode<synchronous>, transform_indices = @transform_3, window_bounds = array<i64: 4, 128>}, {pipeline_mode = #tpu.pipeline_mode<synchronous>, transform_indices = @transform_4, window_bounds = array<i64: 32, 128>}]} {
    %c16_i32 = arith.constant 16 : i32
    %0 = arith.muli %arg0, %c16_i32 : i32
    %1 = tpu.assume_multiple %0, 8 : i32
    %c0 = arith.constant 0 : index
    %c0_0 = arith.constant 0 : index
    %c0_1 = arith.constant 0 : index
    %2 = vector.load %arg1[%c0, %c0_0, %c0_1] : memref<1x16x64xf32, #tpu.memory_space<vmem>>, vector<1x16x64xf32>
    %3 = vector.shape_cast %2 : vector<1x16x64xf32> to vector<16x64xf32>
    %c0_2 = arith.constant 0 : index
    %c0_3 = arith.constant 0 : index
    %4 = vector.load %arg2[%c0_2, %c0_3] : memref<64x384xf32, #tpu.memory_space<vmem>>, vector<64x384xf32>
    %cst = arith.constant dense<0.000000e+00> : vector<16x384xf32>
    %5 = tpu.matmul %3, %4, %cst {dimension_numbers = #tpu.dot_dimension_numbers<[1], [0], [0], [1], [0, 0, 1, 1], [], []>} : vector<16x64xf32>, vector<64x384xf32>, vector<16x384xf32> -> vector<16x384xf32>
    %6 = vector.extract_strided_slice %5 {offsets = [0, 0], sizes = [16, 128], strides = [1, 1]} : vector<16x384xf32> to vector<16x128xf32>
    %7 = vector.extract_strided_slice %5 {offsets = [0, 128], sizes = [16, 128], strides = [1, 1]} : vector<16x384xf32> to vector<16x128xf32>
    %8 = vector.extract_strided_slice %5 {offsets = [0, 256], sizes = [16, 128], strides = [1, 1]} : vector<16x384xf32> to vector<16x128xf32>
    %9 = tpu.iota {dimensions = array<i32: 0>} : vector<16x16xi32>
    %10 = tpu.iota {dimensions = array<i32: 1>} : vector<16x16xi32>
    %11 = arith.subi %9, %10 : vector<16x16xi32>
    %c1_i32 = arith.constant 1 : i32
    %12 = vector.broadcast %c1_i32 : i32 to vector<16x16xi32>
    %13 = arith.cmpi eq, %11, %12 : vector<16x16xi32>
    %14 = arith.subi %10, %9 : vector<16x16xi32>
    %c1_i32_4 = arith.constant 1 : i32
    %15 = vector.broadcast %c1_i32_4 : i32 to vector<16x16xi32>
    %16 = arith.cmpi eq, %14, %15 : vector<16x16xi32>
    %17 = arith.extui %13 : vector<16x16xi1> to vector<16x16xi32>
    %18 = arith.sitofp %17 : vector<16x16xi32> to vector<16x16xf32>
    %19 = arith.extui %16 : vector<16x16xi1> to vector<16x16xi32>
    %20 = arith.sitofp %19 : vector<16x16xi32> to vector<16x16xf32>
    %cst_5 = arith.constant dense<0.000000e+00> : vector<16x128xf32>
    %21 = tpu.matmul %18, %6, %cst_5 {dimension_numbers = #tpu.dot_dimension_numbers<[1], [0], [0], [1], [0, 0, 1, 1], [], []>} : vector<16x16xf32>, vector<16x128xf32>, vector<16x128xf32> -> vector<16x128xf32>
    %22 = arith.addf %7, %21 : vector<16x128xf32>
    %cst_6 = arith.constant dense<0.000000e+00> : vector<16x128xf32>
    %23 = tpu.matmul %20, %8, %cst_6 {dimension_numbers = #tpu.dot_dimension_numbers<[1], [0], [0], [1], [0, 0, 1, 1], [], []>} : vector<16x16xf32>, vector<16x128xf32>, vector<16x128xf32> -> vector<16x128xf32>
    %24 = arith.addf %22, %23 : vector<16x128xf32>
    %25 = arith.index_cast %1 : i32 to index
    %c0_7 = arith.constant 0 : index
    %26 = vector.load %arg6[%25, %c0_7] : memref<32x128xf32, #tpu.memory_space<vmem>>, vector<16x128xf32>
    tpu.vector_store %arg6[%25, %c0_7], %24 {strides = array<i32>} : memref<32x128xf32, #tpu.memory_space<vmem>>, vector<16x128xf32>,
    %c1_i32_8 = arith.constant 1 : i32
    %27 = arith.cmpi eq, %arg0, %c1_i32_8 : i32
    %28 = arith.extui %27 : i1 to i32
    %c0_i32 = arith.constant 0 : i32
    %29 = arith.cmpi ne, %28, %c0_i32 : i32
    scf.if %29 {
      %30 = tpu.iota {dimensions = array<i32: 0>} : vector<128x8xi32>
      %31 = tpu.iota {dimensions = array<i32: 1>} : vector<128x8xi32>
      %c8_i32 = arith.constant 8 : i32
      %c0_i32_9 = arith.constant 0 : i32
      %32 = arith.cmpi eq, %c8_i32, %c0_i32_9 : i32
      %c1_i32_10 = arith.constant 1 : i32
      %33 = arith.select %32, %c1_i32_10, %c8_i32 : i32
      %34 = vector.broadcast %33 : i32 to vector<128x8xi32>
      %35 = arith.remsi %30, %34 : vector<128x8xi32>
      %c0_i32_11 = arith.constant 0 : i32
      %36 = vector.broadcast %c0_i32_11 : i32 to vector<128x8xi32>
      %37 = arith.cmpi ne, %35, %36 : vector<128x8xi32>
      %c0_i32_12 = arith.constant 0 : i32
      %38 = vector.broadcast %c0_i32_12 : i32 to vector<128x8xi32>
      %39 = arith.cmpi slt, %35, %38 : vector<128x8xi32>
      %c0_i32_13 = arith.constant 0 : i32
      %40 = arith.cmpi slt, %33, %c0_i32_13 : i32
      %41 = vector.broadcast %40 : i1 to vector<128x8xi1>
      %42 = vector.broadcast %41 : vector<128x8xi1> to vector<128x8xi1>
      %43 = arith.xori %39, %42 : vector<128x8xi1>
      %44 = arith.andi %43, %37 : vector<128x8xi1>
      %45 = vector.broadcast %33 : i32 to vector<128x8xi32>
      %46 = arith.addi %35, %45 : vector<128x8xi32>
      %47 = arith.select %44, %46, %35 : vector<128x8xi1>, vector<128x8xi32>
      %48 = arith.cmpi eq, %47, %31 : vector<128x8xi32>
      %49 = arith.extui %48 : vector<128x8xi1> to vector<128x8xi32>
      %50 = arith.sitofp %49 : vector<128x8xi32> to vector<128x8xf32>
      %51 = tpu.iota {dimensions = array<i32: 0>} : vector<8x128xi32>
      %52 = tpu.iota {dimensions = array<i32: 1>} : vector<8x128xi32>
      %c8_i32_14 = arith.constant 8 : i32
      %c0_i32_15 = arith.constant 0 : i32
      %53 = arith.cmpi eq, %c8_i32_14, %c0_i32_15 : i32
      %c1_i32_16 = arith.constant 1 : i32
      %54 = arith.select %53, %c1_i32_16, %c8_i32_14 : i32
      %55 = vector.broadcast %54 : i32 to vector<8x128xi32>
      %56 = arith.remsi %52, %55 : vector<8x128xi32>
      %c0_i32_17 = arith.constant 0 : i32
      %57 = vector.broadcast %c0_i32_17 : i32 to vector<8x128xi32>
      %58 = arith.cmpi ne, %56, %57 : vector<8x128xi32>
      %c0_i32_18 = arith.constant 0 : i32
      %59 = vector.broadcast %c0_i32_18 : i32 to vector<8x128xi32>
      %60 = arith.cmpi slt, %56, %59 : vector<8x128xi32>
      %c0_i32_19 = arith.constant 0 : i32
      %61 = arith.cmpi slt, %54, %c0_i32_19 : i32
      %62 = vector.broadcast %61 : i1 to vector<8x128xi1>
      %63 = vector.broadcast %62 : vector<8x128xi1> to vector<8x128xi1>
      %64 = arith.xori %60, %63 : vector<8x128xi1>
      %65 = arith.andi %64, %58 : vector<8x128xi1>
      %66 = vector.broadcast %54 : i32 to vector<8x128xi32>
      %67 = arith.addi %56, %66 : vector<8x128xi32>
      %68 = arith.select %65, %67, %56 : vector<8x128xi1>, vector<8x128xi32>
      %69 = arith.cmpi eq, %68, %51 : vector<8x128xi32>
      %70 = arith.extui %69 : vector<8x128xi1> to vector<8x128xi32>
      %71 = arith.sitofp %70 : vector<8x128xi32> to vector<8x128xf32>
      %c0_20 = arith.constant 0 : index
      %c0_21 = arith.constant 0 : index
      %72 = vector.load %arg6[%c0_20, %c0_21] : memref<32x128xf32, #tpu.memory_space<vmem>>, vector<32x128xf32>
      %c0_22 = arith.constant 0 : index
      %c0_23 = arith.constant 0 : index
      %73 = vector.load %arg4[%c0_22, %c0_23] : memref<4x128xf32, #tpu.memory_space<vmem>>, vector<1x128xf32>
      %c1 = arith.constant 1 : index
      %c0_24 = arith.constant 0 : index
      %74 = vector.load %arg4[%c1, %c0_24] : memref<4x128xf32, #tpu.memory_space<vmem>>, vector<1x128xf32>
      %cst_25 = arith.constant dense<0.000000e+00> : vector<128xf32>
      %75 = vector.multi_reduction <add>, %72, %cst_25 [0] : vector<32x128xf32> to vector<128xf32>
      %76 = vector.shape_cast %75 : vector<128xf32> to vector<1x128xf32>
      %cst_26 = arith.constant dense<0.000000e+00> : vector<1x8xf32>
      %77 = tpu.matmul %76, %50, %cst_26 {dimension_numbers = #tpu.dot_dimension_numbers<[1], [0], [0], [1], [0, 0, 1, 1], [], []>} : vector<1x128xf32>, vector<128x8xf32>, vector<1x8xf32> -> vector<1x8xf32>
      %cst_27 = arith.constant 0.001953125 : f32
      %78 = vector.broadcast %cst_27 : f32 to vector<1x8xf32>
      %79 = arith.mulf %77, %78 : vector<1x8xf32>
      %cst_28 = arith.constant dense<0.000000e+00> : vector<1x128xf32>
      %80 = tpu.matmul %79, %71, %cst_28 {dimension_numbers = #tpu.dot_dimension_numbers<[1], [0], [0], [1], [0, 0, 1, 1], [], []>} : vector<1x8xf32>, vector<8x128xf32>, vector<1x128xf32> -> vector<1x128xf32>
      %81 = vector.broadcast %80 : vector<1x128xf32> to vector<32x128xf32>
      %82 = arith.subf %72, %81 : vector<32x128xf32>
      %83 = arith.mulf %82, %82 : vector<32x128xf32>
      %cst_29 = arith.constant dense<0.000000e+00> : vector<128xf32>
      %84 = vector.multi_reduction <add>, %83, %cst_29 [0] : vector<32x128xf32> to vector<128xf32>
      %85 = vector.shape_cast %84 : vector<128xf32> to vector<1x128xf32>
      %cst_30 = arith.constant dense<0.000000e+00> : vector<1x8xf32>
      %86 = tpu.matmul %85, %50, %cst_30 {dimension_numbers = #tpu.dot_dimension_numbers<[1], [0], [0], [1], [0, 0, 1, 1], [], []>} : vector<1x128xf32>, vector<128x8xf32>, vector<1x8xf32> -> vector<1x8xf32>
      %cst_31 = arith.constant 0.001953125 : f32
      %87 = vector.broadcast %cst_31 : f32 to vector<1x8xf32>
      %88 = arith.mulf %86, %87 : vector<1x8xf32>
      %cst_32 = arith.constant 9.99999974E-6 : f32
      %89 = vector.broadcast %cst_32 : f32 to vector<1x8xf32>
      %90 = arith.addf %88, %89 : vector<1x8xf32>
      %91 = math.rsqrt %90 : vector<1x8xf32>
      %cst_33 = arith.constant dense<0.000000e+00> : vector<1x128xf32>
      %92 = tpu.matmul %91, %71, %cst_33 {dimension_numbers = #tpu.dot_dimension_numbers<[1], [0], [0], [1], [0, 0, 1, 1], [], []>} : vector<1x8xf32>, vector<8x128xf32>, vector<1x128xf32> -> vector<1x128xf32>
      %93 = arith.mulf %92, %73 : vector<1x128xf32>
      %94 = vector.broadcast %93 : vector<1x128xf32> to vector<32x128xf32>
      %95 = arith.mulf %82, %94 : vector<32x128xf32>
      %96 = vector.broadcast %74 : vector<1x128xf32> to vector<32x128xf32>
      %97 = arith.addf %95, %96 : vector<32x128xf32>
      %cst_34 = arith.constant 0.000000e+00 : f32
      %98 = vector.broadcast %cst_34 : f32 to vector<32x128xf32>
      %99 = arith.maximumf %97, %98 : vector<32x128xf32>
      %c0_35 = arith.constant 0 : index
      %c0_36 = arith.constant 0 : index
      %100 = vector.load %arg3[%c0_35, %c0_36] : memref<128x384xf32, #tpu.memory_space<vmem>>, vector<128x384xf32>
      %cst_37 = arith.constant dense<0.000000e+00> : vector<32x384xf32>
      %101 = tpu.matmul %99, %100, %cst_37 {dimension_numbers = #tpu.dot_dimension_numbers<[1], [0], [0], [1], [0, 0, 1, 1], [], []>} : vector<32x128xf32>, vector<128x384xf32>, vector<32x384xf32> -> vector<32x384xf32>
      %102 = vector.extract_strided_slice %101 {offsets = [0, 0], sizes = [32, 128], strides = [1, 1]} : vector<32x384xf32> to vector<32x128xf32>
      %103 = vector.extract_strided_slice %101 {offsets = [0, 128], sizes = [32, 128], strides = [1, 1]} : vector<32x384xf32> to vector<32x128xf32>
      %104 = vector.extract_strided_slice %101 {offsets = [0, 256], sizes = [32, 128], strides = [1, 1]} : vector<32x384xf32> to vector<32x128xf32>
      %105 = tpu.iota {dimensions = array<i32: 0>} : vector<32x32xi32>
      %106 = tpu.iota {dimensions = array<i32: 1>} : vector<32x32xi32>
      %107 = arith.subi %105, %106 : vector<32x32xi32>
      %c1_i32_38 = arith.constant 1 : i32
      %108 = vector.broadcast %c1_i32_38 : i32 to vector<32x32xi32>
      %109 = arith.cmpi eq, %107, %108 : vector<32x32xi32>
      %110 = arith.subi %106, %105 : vector<32x32xi32>
      %c1_i32_39 = arith.constant 1 : i32
      %111 = vector.broadcast %c1_i32_39 : i32 to vector<32x32xi32>
      %112 = arith.cmpi eq, %110, %111 : vector<32x32xi32>
      %c16_i32_40 = arith.constant 16 : i32
      %113 = vector.broadcast %c16_i32_40 : i32 to vector<32x32xi32>
      %114 = arith.cmpi ne, %105, %113 : vector<32x32xi32>
      %115 = arith.andi %109, %114 : vector<32x32xi1>
      %c16_i32_41 = arith.constant 16 : i32
      %116 = vector.broadcast %c16_i32_41 : i32 to vector<32x32xi32>
      %117 = arith.cmpi ne, %106, %116 : vector<32x32xi32>
      %118 = arith.andi %112, %117 : vector<32x32xi1>
      %119 = arith.extui %115 : vector<32x32xi1> to vector<32x32xi32>
      %120 = arith.sitofp %119 : vector<32x32xi32> to vector<32x32xf32>
      %121 = arith.extui %118 : vector<32x32xi1> to vector<32x32xi32>
      %122 = arith.sitofp %121 : vector<32x32xi32> to vector<32x32xf32>
      %cst_42 = arith.constant dense<0.000000e+00> : vector<32x128xf32>
      %123 = tpu.matmul %120, %102, %cst_42 {dimension_numbers = #tpu.dot_dimension_numbers<[1], [0], [0], [1], [0, 0, 1, 1], [], []>} : vector<32x32xf32>, vector<32x128xf32>, vector<32x128xf32> -> vector<32x128xf32>
      %124 = arith.addf %103, %123 : vector<32x128xf32>
      %cst_43 = arith.constant dense<0.000000e+00> : vector<32x128xf32>
      %125 = tpu.matmul %122, %104, %cst_43 {dimension_numbers = #tpu.dot_dimension_numbers<[1], [0], [0], [1], [0, 0, 1, 1], [], []>} : vector<32x32xf32>, vector<32x128xf32>, vector<32x128xf32> -> vector<32x128xf32>
      %126 = arith.addf %124, %125 : vector<32x128xf32>
      %c2 = arith.constant 2 : index
      %c0_44 = arith.constant 0 : index
      %127 = vector.load %arg4[%c2, %c0_44] : memref<4x128xf32, #tpu.memory_space<vmem>>, vector<1x128xf32>
      %c3 = arith.constant 3 : index
      %c0_45 = arith.constant 0 : index
      %128 = vector.load %arg4[%c3, %c0_45] : memref<4x128xf32, #tpu.memory_space<vmem>>, vector<1x128xf32>
      %cst_46 = arith.constant dense<0.000000e+00> : vector<128xf32>
      %129 = vector.multi_reduction <add>, %126, %cst_46 [0] : vector<32x128xf32> to vector<128xf32>
      %130 = vector.shape_cast %129 : vector<128xf32> to vector<1x128xf32>
      %cst_47 = arith.constant dense<0.000000e+00> : vector<1x8xf32>
      %131 = tpu.matmul %130, %50, %cst_47 {dimension_numbers = #tpu.dot_dimension_numbers<[1], [0], [0], [1], [0, 0, 1, 1], [], []>} : vector<1x128xf32>, vector<128x8xf32>, vector<1x8xf32> -> vector<1x8xf32>
      %cst_48 = arith.constant 0.001953125 : f32
      %132 = vector.broadcast %cst_48 : f32 to vector<1x8xf32>
      %133 = arith.mulf %131, %132 : vector<1x8xf32>
      %cst_49 = arith.constant dense<0.000000e+00> : vector<1x128xf32>
      %134 = tpu.matmul %133, %71, %cst_49 {dimension_numbers = #tpu.dot_dimension_numbers<[1], [0], [0], [1], [0, 0, 1, 1], [], []>} : vector<1x8xf32>, vector<8x128xf32>, vector<1x128xf32> -> vector<1x128xf32>
      %135 = vector.broadcast %134 : vector<1x128xf32> to vector<32x128xf32>
      %136 = arith.subf %126, %135 : vector<32x128xf32>
      %137 = arith.mulf %136, %136 : vector<32x128xf32>
      %cst_50 = arith.constant dense<0.000000e+00> : vector<128xf32>
      %138 = vector.multi_reduction <add>, %137, %cst_50 [0] : vector<32x128xf32> to vector<128xf32>
      %139 = vector.shape_cast %138 : vector<128xf32> to vector<1x128xf32>
      %cst_51 = arith.constant dense<0.000000e+00> : vector<1x8xf32>
      %140 = tpu.matmul %139, %50, %cst_51 {dimension_numbers = #tpu.dot_dimension_numbers<[1], [0], [0], [1], [0, 0, 1, 1], [], []>} : vector<1x128xf32>, vector<128x8xf32>, vector<1x8xf32> -> vector<1x8xf32>
      %cst_52 = arith.constant 0.001953125 : f32
      %141 = vector.broadcast %cst_52 : f32 to vector<1x8xf32>
      %142 = arith.mulf %140, %141 : vector<1x8xf32>
      %cst_53 = arith.constant 9.99999974E-6 : f32
      %143 = vector.broadcast %cst_53 : f32 to vector<1x8xf32>
      %144 = arith.addf %142, %143 : vector<1x8xf32>
      %145 = math.rsqrt %144 : vector<1x8xf32>
      %cst_54 = arith.constant dense<0.000000e+00> : vector<1x128xf32>
      %146 = tpu.matmul %145, %71, %cst_54 {dimension_numbers = #tpu.dot_dimension_numbers<[1], [0], [0], [1], [0, 0, 1, 1], [], []>} : vector<1x8xf32>, vector<8x128xf32>, vector<1x128xf32> -> vector<1x128xf32>
      %147 = arith.mulf %146, %127 : vector<1x128xf32>
      %148 = vector.broadcast %147 : vector<1x128xf32> to vector<32x128xf32>
      %149 = arith.mulf %136, %148 : vector<32x128xf32>
      %150 = vector.broadcast %128 : vector<1x128xf32> to vector<32x128xf32>
      %151 = arith.addf %149, %150 : vector<32x128xf32>
      %cst_55 = arith.constant 0.000000e+00 : f32
      %152 = vector.broadcast %cst_55 : f32 to vector<32x128xf32>
      %153 = arith.maximumf %151, %152 : vector<32x128xf32>
      %c0_56 = arith.constant 0 : index
      %c0_57 = arith.constant 0 : index
      %154 = vector.load %arg5[%c0_56, %c0_57] : memref<32x128xf32, #tpu.memory_space<vmem>>, vector<32x128xf32>
      tpu.vector_store %arg5[%c0_56, %c0_57], %153 {strides = array<i32>} : memref<32x128xf32, #tpu.memory_space<vmem>>, vector<32x128xf32>,
    } else {
    }
    return
  }
  func.func @transform_0(%arg0: i32) -> (i32, i32, i32) {
    %c0_i32 = arith.constant 0 : i32
    %c0_i32_0 = arith.constant 0 : i32
    %c0_i32_1 = arith.constant 0 : i32
    return %arg0, %c0_i32, %c0_i32_0 : i32, i32, i32
  }
  func.func @transform_1(%arg0: i32) -> (i32, i32) {
    %c0_i32 = arith.constant 0 : i32
    %c0_i32_0 = arith.constant 0 : i32
    %c0_i32_1 = arith.constant 0 : i32
    return %c0_i32, %c0_i32_0 : i32, i32
  }
  func.func @transform_2(%arg0: i32) -> (i32, i32) {
    %c0_i32 = arith.constant 0 : i32
    %c0_i32_0 = arith.constant 0 : i32
    %c0_i32_1 = arith.constant 0 : i32
    return %c0_i32, %c0_i32_0 : i32, i32
  }
  func.func @transform_3(%arg0: i32) -> (i32, i32) {
    %c0_i32 = arith.constant 0 : i32
    %c0_i32_0 = arith.constant 0 : i32
    %c0_i32_1 = arith.constant 0 : i32
    return %c0_i32, %c0_i32_0 : i32, i32
  }
  func.func @transform_4(%arg0: i32) -> (i32, i32) {
    %c0_i32 = arith.constant 0 : i32
    %c0_i32_0 = arith.constant 0 : i32
    %c0_i32_1 = arith.constant 0 : i32
    return %c0_i32, %c0_i32_0 : i32, i32
  }
}

</mosaic_0001>

<llo_original>
// kernel: tile.23
$region0: #{tile.23}
  #allocation0 [shape = 's32[1]{0}', space=sflag, size = 0x4, scoped, tag = 'scoped memory for tile.23']
  %s0 = inlined_call_operand.vmem [shape: f32[8], index: 0, kind: input, shape index: {}]
  %s1 = inlined_call_operand.vmem [shape: f32[16,8], index: 1, kind: output, shape index: {}]
  // Predicated region
  $region2: #{tile.23} parent=0 // pred_check
    _
  $region3: #{tile.23} parent=0 // pred_check_branch
    %3 = sbr.rel (0) target = $region5
  $region4: #{tile.23} parent=0 // pred_region
    _
  $region5: #{tile.23} parent=0 // pred_fallthru
    _
  %v4 = vld [vmem:[%s0] ss:$0 sm:$0xff]
  %5 = vst [vmem:[%s1] sm:$0xff] %v4
  %s6 = scalar_lea.vmem %s1, 8
  %7 = vst [vmem:[%s6] sm:$0xff] %v4

// kernel: tile.36
$region0: #{tile.36}
  %s0 = inlined_call_operand.vmem [shape: f32[16,8], index: 0, kind: input, shape index: {}]
  %s1 = inlined_call_operand.vmem [shape: f32[1,128], index: 1, kind: output, shape index: {}]
  $region1: #{tile.36} parent=0
    #allocation0 [shape = 'u8[4096]{0}', space=vmem, size = 0x1000, scoped, tag = 'scoped mem for output reshape']
    %v2 = vld [vmem:[%s0] sm:$0x1]
    %vm3 = vcmask 64512
    %4 = vst.msk [vmem:[#allocation0] sm:$0x1] %vm3, %v2
    %s5 = scalar_lea.vmem %s0, 15
    %v6 = vld [vmem:[%s5] sm:$0x1]
    %7 = vrot.lane.b32.xlu0 %v6, 120
    %v8 = vpop.permute.xlu0 %7
    %vm9 = vcmask 1048512
    %10 = vst.msk [vmem:[#allocation0] sm:$0x1] %vm9, %v8
    %s11 = scalar_lea.vmem %s0, 14
    %v12 = vld [vmem:[%s11] sm:$0x1]
    %13 = vrot.lane.b32.xlu0 %v12, 112
    %v14 = vpop.permute.xlu0 %13
    %vm15 = vcmask 982912
    %16 = vst.msk [vmem:[#allocation0] sm:$0x1] %vm15, %v14
    %s17 = scalar_lea.vmem %s0, 13
    %v18 = vld [vmem:[%s17] sm:$0x1]
    %19 = vrot.lane.b32.xlu0 %v18, 104
    %v20 = vpop.permute.xlu0 %19
    %vm21 = vcmask 917312
    %22 = vst.msk [vmem:[#allocation0] sm:$0x1] %vm21, %v20
    %s23 = scalar_lea.vmem %s0, 12
    %v24 = vld [vmem:[%s23] sm:$0x1]
    %25 = vrot.lane.b32.xlu0 %v24, 96
    %v26 = vpop.permute.xlu0 %25
    %vm27 = vcmask 851712
    %28 = vst.msk [vmem:[#allocation0] sm:$0x1] %vm27, %v26
    %s29 = scalar_lea.vmem %s0, 11
    %v30 = vld [vmem:[%s29] sm:$0x1]
    %31 = vrot.lane.b32.xlu0 %v30, 88
    %v32 = vpop.permute.xlu0 %31
    %vm33 = vcmask 786112
    %34 = vst.msk [vmem:[#allocation0] sm:$0x1] %vm33, %v32
    %s35 = scalar_lea.vmem %s0, 10
    %v36 = vld [vmem:[%s35] sm:$0x1]
    %37 = vrot.lane.b32.xlu0 %v36, 80
    %v38 = vpop.permute.xlu0 %37
    %vm39 = vcmask 720512
    %40 = vst.msk [vmem:[#allocation0] sm:$0x1] %vm39, %v38
    %s41 = scalar_lea.vmem %s0, 9
    %v42 = vld [vmem:[%s41] sm:$0x1]
    %43 = vrot.lane.b32.xlu0 %v42, 72
    %v44 = vpop.permute.xlu0 %43
    %vm45 = vcmask 654912
    %46 = vst.msk [vmem:[#allocation0] sm:$0x1] %vm45, %v44
    %s47 = scalar_lea.vmem %s0, 8
    %v48 = vld [vmem:[%s47] sm:$0x1]
    %49 = vrot.lane.b32.xlu0 %v48, 64
    %v50 = vpop.permute.xlu0 %49
    %vm51 = vcmask 589312
    %52 = vst.msk [vmem:[#allocation0] sm:$0x1] %vm51, %v50
    %s53 = scalar_lea.vmem %s0, 7
    %v54 = vld [vmem:[%s53] sm:$0x1]
    %55 = vrot.lane.b32.xlu0 %v54, 56
    %v56 = vpop.permute.xlu0 %55
    %vm57 = vcmask 523712
    %58 = vst.msk [vmem:[#allocation0] sm:$0x1] %vm57, %v56
    %s59 = scalar_lea.vmem %s0, 6
    %v60 = vld [vmem:[%s59] sm:$0x1]
    %61 = vrot.lane.b32.xlu0 %v60, 48
    %v62 = vpop.permute.xlu0 %61
    %vm63 = vcmask 458112
    %64 = vst.msk [vmem:[#allocation0] sm:$0x1] %vm63, %v62
    %s65 = scalar_lea.vmem %s0, 5
    %v66 = vld [vmem:[%s65] sm:$0x1]
    %67 = vrot.lane.b32.xlu0 %v66, 40
    %v68 = vpop.permute.xlu0 %67
    %vm69 = vcmask 392512
    %70 = vst.msk [vmem:[#allocation0] sm:$0x1] %vm69, %v68
    %s71 = scalar_lea.vmem %s0, 4
    %v72 = vld [vmem:[%s71] sm:$0x1]
    %73 = vrot.lane.b32.xlu0 %v72, 32
    %v74 = vpop.permute.xlu0 %73
    %vm75 = vcmask 326912
    %76 = vst.msk [vmem:[#allocation0] sm:$0x1] %vm75, %v74
    %s77 = scalar_lea.vmem %s0, 3
    %v78 = vld [vmem:[%s77] sm:$0x1]
    %79 = vrot.lane.b32.xlu0 %v78, 24
    %v80 = vpop.permute.xlu0 %79
    %vm81 = vcmask 261312
    %82 = vst.msk [vmem:[#allocation0] sm:$0x1] %vm81, %v80
    %s83 = scalar_lea.vmem %s0, 2
    %v84 = vld [vmem:[%s83] sm:$0x1]
    %85 = vrot.lane.b32.xlu0 %v84, 16
    %v86 = vpop.permute.xlu0 %85
    %vm87 = vcmask 195712
    %88 = vst.msk [vmem:[#allocation0] sm:$0x1] %vm87, %v86
    %s89 = scalar_lea.vmem %s0, 1
    %v90 = vld [vmem:[%s89] sm:$0x1]
    %91 = vrot.lane.b32.xlu0 %v90, 8
    %v92 = vpop.permute.xlu0 %91
    %vm93 = vcmask 130112
    %94 = vst.msk [vmem:[#allocation0] sm:$0x1] %vm93, %v92
    %s96 = sshll.u32 1, 1
    %s97 = ssub.s32 %s96, 1
    %v99 = vld [vmem:[#allocation0] sm:%s97]
    %s100 = sshll.u32 1, 1
    %s101 = ssub.s32 %s100, 1
    %102 = vst [vmem:[%s1] sm:%s101] %v99

// kernel: local_feature_enhancement.1
$region0: #{local_feature_enhancement.1}
  #allocation0 [shape = 'u32[]', space=smem, size = 0x4, offset = 0x4, fixed_abs, tag = 'smem constant byte address 0x4 - core index']
  #allocation1 [shape = 'u32[144,128]{1,0:T(1,128)}', space=vmem, size = 0x12000, scoped, tag = 'internal scratch']
  #allocation2 [shape = 'f32[32,128]{1,0:T(8,128)}', space=vmem, size = 0x4000, scoped, tag = 'scratch operand']
  %s0 = inlined_call_operand.vmem [shape: f32[2,16,64], index: 0, kind: input, shape index: {}]
  %s1 = inlined_call_operand.vmem [shape: f32[64,384], index: 1, kind: input, shape index: {}]
  %s2 = inlined_call_operand.vmem [shape: f32[128,384], index: 2, kind: input, shape index: {}]
  %s3 = inlined_call_operand.vmem [shape: f32[4,128], index: 3, kind: input, shape index: {}]
  %s4 = inlined_call_operand.vmem [shape: f32[32,128], index: 4, kind: output, shape index: {}]
  %s5 = sld [smem:[#allocation0]]
  $region53: #{local_feature_enhancement.1} parent=0
    _
  %s7 = ssub.s32 1, %s5
  %s8 = scalar_select 0, %s7, %s5
  loop: start=0, step=1, limit=4
  $region2: #{local_feature_enhancement.1} parent=0 // loop_pre_header
    _
  $region3: #{local_feature_enhancement.1} parent=0 // loop_header
    %s10 = sphi 0, %s14
    %p11 = scmp.ge.s32.totalorder %s10, 4
    %s20 = sphi 0, %s22
    %s23 = sphi 0, %s20
    %s24 = sphi 0, %s23
    %s40 = sphi 0, %s24
    %s44 = sphi 0, %s44
    %s46 = sphi 0, %s44
    %s47 = sphi 0, %s46
    %s61 = sphi 0, %s47
    %s65 = sphi 0, %s65
    %s67 = sphi 0, %s65
    %s68 = sphi 0, %s67
    %s82 = sphi 0, %s68
    %s86 = sphi 0, %s86
    %s88 = sphi 0, %s86
    %s89 = sphi 0, %s88
    %s103 = sphi 0, %s89
    %s107 = sphi 0, %s107
    %s109 = sphi 0, %s107
    %s110 = sphi 0, %s109
    %s124 = sphi 0, %s110
  $region4: #{local_feature_enhancement.1} parent=0 // loop_header_branch
    %13 = sbr.rel (%p11) target = $region8
  $region5: #{local_feature_enhancement.1} parent=0 // loop_body
    %s15 = ssub.s32 %s10, 1
    %s16 = ssub.s32 %s10, 2
    %s17 = sadd.s32 %s10, 1
    %s18 = ssub.s32 %s10, %s17
    %p19 = scmp.eq.s32.totalorder %s18, 0
    %s21 = sadd.s32 %s20, 1
    %s22 = scalar_select %p19, %s20, %s21
    %p25 = pneg %p19
    %p26 = scmp.eq.s32.totalorder %s10, 1
    %p27 = por %p25, %p26
    %p28 = scmp.ne.s32.totalorder %s20, %s23
    %p29 = scmp.eq.s32.totalorder %s10, 0
    %p30 = por %p28, %p29
    %p31 = scmp.ne.s32.totalorder %s20, %s23
    %p32 = scmp.eq.s32.totalorder %s15, 1
    %p33 = por %p31, %p32
    %p34 = scmp.ne.s32.totalorder %s23, %s24
    %p35 = scmp.eq.s32.totalorder %s15, 0
    %p36 = por %p34, %p35
    %p37 = scmp.ne.s32.totalorder %s23, %s24
    %p38 = scmp.eq.s32.totalorder %s16, 1
    %p39 = por %p37, %p38
    %p41 = scmp.ne.s32.totalorder %s24, %s40
    %p42 = scmp.eq.s32.totalorder %s16, 0
    %p43 = por %p41, %p42
    %s45 = sadd.s32 %s44, 1
    %p48 = scmp.eq.s32.totalorder %s10, 1
    %p49 = scmp.ne.s32.totalorder %s44, %s46
    %p50 = scmp.eq.s32.totalorder %s10, 0
    %p51 = por %p49, %p50
    %p52 = scmp.ne.s32.totalorder %s44, %s46
    %p53 = scmp.eq.s32.totalorder %s15, 1
    %p54 = por %p52, %p53
    %p55 = scmp.ne.s32.totalorder %s46, %s47
    %p56 = scmp.eq.s32.totalorder %s15, 0
    %p57 = por %p55, %p56
    %p58 = scmp.ne.s32.totalorder %s46, %s47
    %p59 = scmp.eq.s32.totalorder %s16, 1
    %p60 = por %p58, %p59
    %p62 = scmp.ne.s32.totalorder %s47, %s61
    %p63 = scmp.eq.s32.totalorder %s16, 0
    %p64 = por %p62, %p63
    %s66 = sadd.s32 %s65, 1
    %p69 = scmp.eq.s32.totalorder %s10, 1
    %p70 = scmp.ne.s32.totalorder %s65, %s67
    %p71 = scmp.eq.s32.totalorder %s10, 0
    %p72 = por %p70, %p71
    %p73 = scmp.ne.s32.totalorder %s65, %s67
    %p74 = scmp.eq.s32.totalorder %s15, 1
    %p75 = por %p73, %p74
    %p76 = scmp.ne.s32.totalorder %s67, %s68
    %p77 = scmp.eq.s32.totalorder %s15, 0
    %p78 = por %p76, %p77
    %p79 = scmp.ne.s32.totalorder %s67, %s68
    %p80 = scmp.eq.s32.totalorder %s16, 1
    %p81 = por %p79, %p80
    %p83 = scmp.ne.s32.totalorder %s68, %s82
    %p84 = scmp.eq.s32.totalorder %s16, 0
    %p85 = por %p83, %p84
    %s87 = sadd.s32 %s86, 1
    %p90 = scmp.eq.s32.totalorder %s10, 1
    %p91 = scmp.ne.s32.totalorder %s86, %s88
    %p92 = scmp.eq.s32.totalorder %s10, 0
    %p93 = por %p91, %p92
    %p94 = scmp.ne.s32.totalorder %s86, %s88
    %p95 = scmp.eq.s32.totalorder %s15, 1
    %p96 = por %p94, %p95
    %p97 = scmp.ne.s32.totalorder %s88, %s89
    %p98 = scmp.eq.s32.totalorder %s15, 0
    %p99 = por %p97, %p98
    %p100 = scmp.ne.s32.totalorder %s88, %s89
    %p101 = scmp.eq.s32.totalorder %s16, 1
    %p102 = por %p100, %p101
    %p104 = scmp.ne.s32.totalorder %s89, %s103
    %p105 = scmp.eq.s32.totalorder %s16, 0
    %p106 = por %p104, %p105
    %s108 = sadd.s32 %s107, 1
    %p111 = scmp.eq.s32.totalorder %s10, 1
    %p112 = scmp.ne.s32.totalorder %s107, %s109
    %p113 = scmp.eq.s32.totalorder %s10, 0
    %p114 = por %p112, %p113
    %p115 = scmp.ne.s32.totalorder %s107, %s109
    %p116 = scmp.eq.s32.totalorder %s15, 1
    %p117 = por %p115, %p116
    %p118 = scmp.ne.s32.totalorder %s109, %s110
    %p119 = scmp.eq.s32.totalorder %s15, 0
    %p120 = por %p118, %p119
    %p121 = scmp.ne.s32.totalorder %s109, %s110
    %p122 = scmp.eq.s32.totalorder %s16, 1
    %p123 = por %p121, %p122
    %p125 = scmp.ne.s32.totalorder %s110, %s124
    %p126 = scmp.eq.s32.totalorder %s16, 0
    %p127 = por %p125, %p126
    %p128 = scmp.le.s32.totalorder 1, %s10
    %p129 = scmp.lt.s32.totalorder %s10, 3
    %p130 = pnand %p128, %p129
    %p131 = pneg %p130
    // Predicated region
    $region9: #{local_feature_enhancement.1} parent=5 // pred_check
      _
    $region10: #{local_feature_enhancement.1} parent=5 // pred_check_branch
      %133 = sbr.rel (%p130) target = $region12
    $region11: #{local_feature_enhancement.1} parent=5 // pred_region
      %s134 = ssub.s32 %s10, 1
      // Predicated region
      $region13: #{local_feature_enhancement.1} parent=11 // pred_check
        %p135 = pneg %p57
      $region14: #{local_feature_enhancement.1} parent=11 // pred_check_branch
        %137 = sbr.rel (%p135) target = $region16
      $region15: #{local_feature_enhancement.1} parent=11 // pred_region
        _
      $region16: #{local_feature_enhancement.1} parent=11 // pred_fallthru
        _
      // Predicated region
      $region17: #{local_feature_enhancement.1} parent=11 // pred_check
        %p138 = pneg %p78
      $region18: #{local_feature_enhancement.1} parent=11 // pred_check_branch
        %140 = sbr.rel (%p138) target = $region20
      $region19: #{local_feature_enhancement.1} parent=11 // pred_region
        _
      $region20: #{local_feature_enhancement.1} parent=11 // pred_fallthru
        _
      // Predicated region
      $region21: #{local_feature_enhancement.1} parent=11 // pred_check
        %p141 = pneg %p99
      $region22: #{local_feature_enhancement.1} parent=11 // pred_check_branch
        %143 = sbr.rel (%p141) target = $region24
      $region23: #{local_feature_enhancement.1} parent=11 // pred_region
        _
      $region24: #{local_feature_enhancement.1} parent=11 // pred_fallthru
        _
    $region12: #{local_feature_enhancement.1} parent=5 // pred_fallthru
      _
    %p144 = scmp.lt.s32.totalorder %s10, 2
    // Predicated region
    $region25: #{local_feature_enhancement.1} parent=5 // pred_check
      %p145 = pneg %p144
    $region26: #{local_feature_enhancement.1} parent=5 // pred_check_branch
      %147 = sbr.rel (%p145) target = $region28
    $region27: #{local_feature_enhancement.1} parent=5 // pred_region
      // Predicated region
      $region29: #{local_feature_enhancement.1} parent=27 // pred_check
        %p148 = pneg %p30
      $region30: #{local_feature_enhancement.1} parent=27 // pred_check_branch
        %150 = sbr.rel (%p148) target = $region32
      $region31: #{local_feature_enhancement.1} parent=27 // pred_region
        %p151 = scmp.lt.s32.totalorder %s10, 1
        %s152 = scalar_select %p151, %s10, 1
        %s153 = smul.addr %s152, 2
        %s154 = smul.addr %s153, 8
        %s155 = scalar_lea.vmem %s0, %s154
      $region32: #{local_feature_enhancement.1} parent=27 // pred_fallthru
        _
    $region28: #{local_feature_enhancement.1} parent=5 // pred_fallthru
      _
    %p156 = scmp.le.s32.totalorder 1, %s10
    %p157 = scmp.lt.s32.totalorder %s10, 3
    %p158 = pnand %p156, %p157
    %p159 = pneg %p158
    // Predicated region
    $region33: #{local_feature_enhancement.1} parent=5 // pred_check
      _
    $region34: #{local_feature_enhancement.1} parent=5 // pred_check_branch
      %161 = sbr.rel (%p158) target = $region36
    $region35: #{local_feature_enhancement.1} parent=5 // pred_region
      %s162 = ssub.s32 %s10, 1
      %p163 = scmp.lt.s32.totalorder %s15, 1
      %s164 = scalar_select %p163, %s15, 1
      %s165 = smul.addr %s164, 2
      %s166 = smul.addr %s165, 8
      %s167 = scalar_lea.vmem %s0, %s166
      %p168 = pneg %p36
      %p169 = pneg %p33
      %p170 = pneg %p57
      %p171 = pneg %p54
      %p172 = pneg %p78
      %p173 = pneg %p75
      %p174 = pneg %p99
      %p175 = pneg %p96
      %p176 = pneg %p120
      %p177 = pneg %p117
      %p178 = scmp.lt.s32.totalorder %s15, 1
      %s179 = scalar_select %p178, %s15, 1
      %s180 = smul.addr %s179, 2
      %s181 = smul.addr %s180, 8
      %s182 = scalar_lea.vmem %s0, %s181
      %s183 = smul.u32 %s15, 16
      %v184 = vld [vmem:[%s182] sm:$0xff]
      %v185 = vld [vmem:[%s182 + $0x8] sm:$0xff]
      %v186 = vld [vmem:[%s1] sm:$0xff]
      %v187 = vld [vmem:[%s1 + $0x8] sm:$0xff]
      %v188 = vld [vmem:[%s1 + $0x10] sm:$0xff]
      %v189 = vld [vmem:[%s1 + $0x18] sm:$0xff]
      %v190 = vld [vmem:[%s1 + $0x20] sm:$0xff]
      %v191 = vld [vmem:[%s1 + $0x28] sm:$0xff]
      %v192 = vld [vmem:[%s1 + $0x30] sm:$0xff]
      %v193 = vld [vmem:[%s1 + $0x38] sm:$0xff]
      %v194 = vld [vmem:[%s1 + $0x40] sm:$0xff]
      %v195 = vld [vmem:[%s1 + $0x48] sm:$0xff]
      %v196 = vld [vmem:[%s1 + $0x50] sm:$0xff]
      %v197 = vld [vmem:[%s1 + $0x58] sm:$0xff]
      %v198 = vld [vmem:[%s1 + $0x60] sm:$0xff]
      %v199 = vld [vmem:[%s1 + $0x68] sm:$0xff]
      %v200 = vld [vmem:[%s1 + $0x70] sm:$0xff]
      %v201 = vld [vmem:[%s1 + $0x78] sm:$0xff]
      %v202 = vld [vmem:[%s1 + $0x80] sm:$0xff]
      %v203 = vld [vmem:[%s1 + $0x88] sm:$0xff]
      %v204 = vld [vmem:[%s1 + $0x90] sm:$0xff]
      %v205 = vld [vmem:[%s1 + $0x98] sm:$0xff]
      %v206 = vld [vmem:[%s1 + $0xa0] sm:$0xff]
      %v207 = vld [vmem:[%s1 + $0xa8] sm:$0xff]
      %v208 = vld [vmem:[%s1 + $0xb0] sm:$0xff]
      %v209 = vld [vmem:[%s1 + $0xb8] sm:$0xff]
      %vm210 = vcmask 523264
      %v212 = vsel %vm210, %v184, 0
      %v215 = vsel %vm210, %v185, 0
      %217 = vmatprep.subr.mxu0 0.0
      %218 = vmatpush1.msra.mxu0 0.0
      %219 = vmatprep.subr.mxu0 0.0
      %220 = vmatpush1.msra.mxu0 0.0
      %221 = vmatprep.subr.mxu0 0.0
      %222 = vmatpush1.msra.mxu0 0.0
      %223 = vmatprep.subr.mxu0 0.0
      %224 = vmatpush1.msra.mxu0 0.0
      %225 = vmatprep.subr.mxu0 0.0
      %226 = vmatpush1.msra.mxu0 0.0
      %227 = vmatprep.subr.mxu0 0.0
      %228 = vmatpush1.msra.mxu0 0.0
      %229 = vmatprep.subr.mxu0 0.0
      %230 = vmatpush1.msra.mxu0 0.0
      %231 = vmatprep.subr.mxu0 0.0
      %232 = vmatpush1.msra.mxu0 0.0
      %233 = vmatprep.subr.mxu0 %v208
      %234 = vmatpush1.msra.mxu0 %v207
      %235 = vmatprep.subr.mxu0 %v205
      %236 = vmatpush1.msra.mxu0 %v204
      %237 = vmatprep.subr.mxu0 %v202
      %238 = vmatpush1.msra.mxu0 %v201
      %239 = vmatprep.subr.mxu0 %v199
      %240 = vmatpush1.msra.mxu0 %v198
      %241 = vmatprep.subr.mxu0 %v196
      %242 = vmatpush1.msra.mxu0 %v195
      %243 = vmatprep.subr.mxu0 %v193
      %244 = vmatpush1.msra.mxu0 %v192
      %245 = vmatprep.subr.mxu0 %v190
      %246 = vmatpush1.msra.mxu0 %v189
      %247 = vmatprep.subr.mxu0 %v187
      %248 = vmatpush1.msra.mxu0 %v186
      %249 = vmatprep.subr.mxu0 0.0
      %250 = vmatpush2.msra.mxu0 0.0
      %251 = vmatprep.subr.mxu0 0.0
      %252 = vmatpush2.msra.mxu0 0.0
      %253 = vmatprep.subr.mxu0 0.0
      %254 = vmatpush2.msra.mxu0 0.0
      %255 = vmatprep.subr.mxu0 0.0
      %256 = vmatpush2.msra.mxu0 0.0
      %257 = vmatprep.subr.mxu0 0.0
      %258 = vmatpush2.msra.mxu0 0.0
      %259 = vmatprep.subr.mxu0 0.0
      %260 = vmatpush2.msra.mxu0 0.0
      %261 = vmatprep.subr.mxu0 0.0
      %262 = vmatpush2.msra.mxu0 0.0
      %263 = vmatprep.subr.mxu0 0.0
      %264 = vmatpush2.msra.mxu0 0.0
      %265 = vmatprep.subr.mxu0 0.0
      %266 = vmatpush2.msra.mxu0 0.0
      %267 = vmatprep.subr.mxu0 0.0
      %268 = vmatpush2.msra.mxu0 0.0
      %269 = vmatprep.subr.mxu0 0.0
      %270 = vmatpush2.msra.mxu0 0.0
      %271 = vmatprep.subr.mxu0 0.0
      %272 = vmatpush2.msra.mxu0 0.0
      %273 = vmatprep.subr.mxu0 0.0
      %274 = vmatpush2.msra.mxu0 0.0
      %275 = vmatprep.subr.mxu0 0.0
      %276 = vmatpush2.msra.mxu0 0.0
      %277 = vmatprep.subr.mxu0 0.0
      %278 = vmatpush2.msra.mxu0 0.0
      %279 = vmatprep.subr.mxu0 0.0
      %280 = vmatpush2.msra.mxu0 0.0
      %281 = vmatprep.mubr.f32.mxu0 0.0
      %282 = vmatmul.mubr.f32.gmra.mxu0 %v212
      %v283 = vpop.f32.mrf.mxu0
      %v284 = vadd.f32 0.0, %v283
      %v285 = vpop.f32.mrf.mxu0
      %v286 = vadd.f32 0.0, %v285
      %287 = vmatprep.mubr.f32.mxu0 0.0
      %288 = vmatmul.mubr.f32.gmra.mxu0 %v215
      %v289 = vpop.f32.mrf.mxu0
      %v290 = vadd.f32 0.0, %v289
      %v291 = vpop.f32.mrf.mxu0
      %v292 = vadd.f32 0.0, %v291
      %293 = vdwg.mxu0
      %294 = vmatprep.subr.mxu0 0.0
      %295 = vmatpush1.msra.mxu0 0.0
      %296 = vmatprep.subr.mxu0 0.0
      %297 = vmatpush1.msra.mxu0 0.0
      %298 = vmatprep.subr.mxu0 0.0
      %299 = vmatpush1.msra.mxu0 0.0
      %300 = vmatprep.subr.mxu0 0.0
      %301 = vmatpush1.msra.mxu0 0.0
      %302 = vmatprep.subr.mxu0 0.0
      %303 = vmatpush1.msra.mxu0 0.0
      %304 = vmatprep.subr.mxu0 0.0
      %305 = vmatpush1.msra.mxu0 0.0
      %306 = vmatprep.subr.mxu0 0.0
      %307 = vmatpush1.msra.mxu0 0.0
      %308 = vmatprep.subr.mxu0 0.0
      %309 = vmatpush1.msra.mxu0 0.0
      %310 = vmatprep.subr.mxu0 0.0
      %311 = vmatpush1.msra.mxu0 %v209
      %312 = vmatprep.subr.mxu0 0.0
      %313 = vmatpush1.msra.mxu0 %v206
      %314 = vmatprep.subr.mxu0 0.0
      %315 = vmatpush1.msra.mxu0 %v203
      %316 = vmatprep.subr.mxu0 0.0
      %317 = vmatpush1.msra.mxu0 %v200
      %318 = vmatprep.subr.mxu0 0.0
      %319 = vmatpush1.msra.mxu0 %v197
      %320 = vmatprep.subr.mxu0 0.0
      %321 = vmatpush1.msra.mxu0 %v194
      %322 = vmatprep.subr.mxu0 0.0
      %323 = vmatpush1.msra.mxu0 %v191
      %324 = vmatprep.subr.mxu0 0.0
      %325 = vmatpush1.msra.mxu0 %v188
      %326 = vmatprep.subr.mxu0 0.0
      %327 = vmatpush2.msra.mxu0 0.0
      %328 = vmatprep.subr.mxu0 0.0
      %329 = vmatpush2.msra.mxu0 0.0
      %330 = vmatprep.subr.mxu0 0.0
      %331 = vmatpush2.msra.mxu0 0.0
      %332 = vmatprep.subr.mxu0 0.0
      %333 = vmatpush2.msra.mxu0 0.0
      %334 = vmatprep.subr.mxu0 0.0
      %335 = vmatpush2.msra.mxu0 0.0
      %336 = vmatprep.subr.mxu0 0.0
      %337 = vmatpush2.msra.mxu0 0.0
      %338 = vmatprep.subr.mxu0 0.0
      %339 = vmatpush2.msra.mxu0 0.0
      %340 = vmatprep.subr.mxu0 0.0
      %341 = vmatpush2.msra.mxu0 0.0
      %342 = vmatprep.subr.mxu0 0.0
      %343 = vmatpush2.msra.mxu0 0.0
      %344 = vmatprep.subr.mxu0 0.0
      %345 = vmatpush2.msra.mxu0 0.0
      %346 = vmatprep.subr.mxu0 0.0
      %347 = vmatpush2.msra.mxu0 0.0
      %348 = vmatprep.subr.mxu0 0.0
      %349 = vmatpush2.msra.mxu0 0.0
      %350 = vmatprep.subr.mxu0 0.0
      %351 = vmatpush2.msra.mxu0 0.0
      %352 = vmatprep.subr.mxu0 0.0
      %353 = vmatpush2.msra.mxu0 0.0
      %354 = vmatprep.subr.mxu0 0.0
      %355 = vmatpush2.msra.mxu0 0.0
      %356 = vmatprep.subr.mxu0 0.0
      %357 = vmatpush2.msra.mxu0 0.0
      %358 = vmatprep.mubr.f32.mxu0 0.0
      %359 = vmatmul.mubr.f32.gmra.mxu0 %v212
      %v360 = vpop.f32.mrf.mxu0
      %v361 = vadd.f32 0.0, %v360
      %v362 = vpop.f32.mrf.mxu0
      %363 = vmatprep.mubr.f32.mxu0 0.0
      %364 = vmatmul.mubr.f32.gmra.mxu0 %v215
      %v365 = vpop.f32.mrf.mxu0
      %v366 = vadd.f32 0.0, %v365
      %v367 = vpop.f32.mrf.mxu0
      %368 = vdwg.mxu0
      %v369 = vlaneseq
      %v370 = vshrl.u32 %v369, 7
      %v371 = vadd.s32 %v370, 8
      %v372 = vlaneseq
      %v373 = vand.u32 %v372, 127
      %v374 = vsub.s32 %v370, %v373
      %v375 = vsub.s32 %v371, %v373
      %vm376 = vcmp.eq.s32.totalorder %v374, 1
      %vm377 = vcmp.eq.s32.totalorder %v375, 1
      %v378 = vsub.s32 %v373, %v370
      %v379 = vsub.s32 %v373, %v371
      %vm380 = vcmp.eq.s32.totalorder %v378, 1
      %vm381 = vcmp.eq.s32.totalorder %v379, 1
      %v382 = vsel %vm376, 1, 0
      %v383 = vsel %vm377, 1, 0
      %v384 = vcvt.s32.f32 %v382
      %v385 = vcvt.s32.f32 %v383
      %v386 = vsel %vm380, 1, 0
      %v387 = vsel %vm381, 1, 0
      %v388 = vcvt.s32.f32 %v386
      %v389 = vcvt.s32.f32 %v387
      %vm390 = vcmask 130048
      %v392 = vsel %vm390, %v384, 0
      %v395 = vsel %vm390, %v385, 0
      %397 = vmatprep.subr.mxu0 0.0
      %398 = vmatpush1.msra.mxu0 0.0
      %399 = vmatprep.subr.mxu0 0.0
      %400 = vmatpush1.msra.mxu0 0.0
      %401 = vmatprep.subr.mxu0 0.0
      %402 = vmatpush1.msra.mxu0 0.0
      %403 = vmatprep.subr.mxu0 0.0
      %404 = vmatpush1.msra.mxu0 0.0
      %405 = vmatprep.subr.mxu0 0.0
      %406 = vmatpush1.msra.mxu0 0.0
      %407 = vmatprep.subr.mxu0 0.0
      %408 = vmatpush1.msra.mxu0 0.0
      %409 = vmatprep.subr.mxu0 0.0
      %410 = vmatpush1.msra.mxu0 0.0
      %411 = vmatprep.subr.mxu0 0.0
      %412 = vmatpush1.msra.mxu0 0.0
      %413 = vmatprep.subr.mxu0 0.0
      %414 = vmatpush1.msra.mxu0 0.0
      %415 = vmatprep.subr.mxu0 0.0
      %416 = vmatpush1.msra.mxu0 0.0
      %417 = vmatprep.subr.mxu0 0.0
      %418 = vmatpush1.msra.mxu0 0.0
      %419 = vmatprep.subr.mxu0 0.0
      %420 = vmatpush1.msra.mxu0 0.0
      %421 = vmatprep.subr.mxu0 0.0
      %422 = vmatpush1.msra.mxu0 0.0
      %423 = vmatprep.subr.mxu0 0.0
      %424 = vmatpush1.msra.mxu0 0.0
      %425 = vmatprep.subr.mxu0 0.0
      %426 = vmatpush1.msra.mxu0 %v290
      %427 = vmatprep.subr.mxu0 0.0
      %428 = vmatpush1.msra.mxu0 %v284
      %429 = vmatprep.subr.mxu0 0.0
      %430 = vmatpush2.msra.mxu0 0.0
      %431 = vmatprep.subr.mxu0 0.0
      %432 = vmatpush2.msra.mxu0 0.0
      %433 = vmatprep.subr.mxu0 0.0
      %434 = vmatpush2.msra.mxu0 0.0
      %435 = vmatprep.subr.mxu0 0.0
      %436 = vmatpush2.msra.mxu0 0.0
      %437 = vmatprep.subr.mxu0 0.0
      %438 = vmatpush2.msra.mxu0 0.0
      %439 = vmatprep.subr.mxu0 0.0
      %440 = vmatpush2.msra.mxu0 0.0
      %441 = vmatprep.subr.mxu0 0.0
      %442 = vmatpush2.msra.mxu0 0.0
      %443 = vmatprep.subr.mxu0 0.0
      %444 = vmatpush2.msra.mxu0 0.0
      %445 = vmatprep.subr.mxu0 0.0
      %446 = vmatpush2.msra.mxu0 0.0
      %447 = vmatprep.subr.mxu0 0.0
      %448 = vmatpush2.msra.mxu0 0.0
      %449 = vmatprep.subr.mxu0 0.0
      %450 = vmatpush2.msra.mxu0 0.0
      %451 = vmatprep.subr.mxu0 0.0
      %452 = vmatpush2.msra.mxu0 0.0
      %453 = vmatprep.subr.mxu0 0.0
      %454 = vmatpush2.msra.mxu0 0.0
      %455 = vmatprep.subr.mxu0 0.0
      %456 = vmatpush2.msra.mxu0 0.0
      %457 = vmatprep.subr.mxu0 0.0
      %458 = vmatpush2.msra.mxu0 0.0
      %459 = vmatprep.subr.mxu0 0.0
      %460 = vmatpush2.msra.mxu0 0.0
      %461 = vmatprep.mubr.f32.mxu0 0.0
      %462 = vmatmul.mubr.f32.gmra.mxu0 %v392
      %v463 = vpop.f32.mrf.mxu0
      %v464 = vadd.f32 0.0, %v463
      %v465 = vpop.f32.mrf.mxu0
      %466 = vmatprep.mubr.f32.mxu0 0.0
      %467 = vmatmul.mubr.f32.gmra.mxu0 %v395
      %v468 = vpop.f32.mrf.mxu0
      %v469 = vadd.f32 0.0, %v468
      %v470 = vpop.f32.mrf.mxu0
      %471 = vdwg.mxu0
      %v472 = vadd.f32 %v286, %v464
      %v473 = vadd.f32 %v292, %v469
      %v475 = vsel %vm390, %v388, 0
      %v478 = vsel %vm390, %v389, 0
      %480 = vmatprep.subr.mxu0 0.0
      %481 = vmatpush1.msra.mxu0 0.0
      %482 = vmatprep.subr.mxu0 0.0
      %483 = vmatpush1.msra.mxu0 0.0
      %484 = vmatprep.subr.mxu0 0.0
      %485 = vmatpush1.msra.mxu0 0.0
      %486 = vmatprep.subr.mxu0 0.0
      %487 = vmatpush1.msra.mxu0 0.0
      %488 = vmatprep.subr.mxu0 0.0
      %489 = vmatpush1.msra.mxu0 0.0
      %490 = vmatprep.subr.mxu0 0.0
      %491 = vmatpush1.msra.mxu0 0.0
      %492 = vmatprep.subr.mxu0 0.0
      %493 = vmatpush1.msra.mxu0 0.0
      %494 = vmatprep.subr.mxu0 0.0
      %495 = vmatpush1.msra.mxu0 0.0
      %496 = vmatprep.subr.mxu0 0.0
      %497 = vmatpush1.msra.mxu0 0.0
      %498 = vmatprep.subr.mxu0 0.0
      %499 = vmatpush1.msra.mxu0 0.0
      %500 = vmatprep.subr.mxu0 0.0
      %501 = vmatpush1.msra.mxu0 0.0
      %502 = vmatprep.subr.mxu0 0.0
      %503 = vmatpush1.msra.mxu0 0.0
      %504 = vmatprep.subr.mxu0 0.0
      %505 = vmatpush1.msra.mxu0 0.0
      %506 = vmatprep.subr.mxu0 0.0
      %507 = vmatpush1.msra.mxu0 0.0
      %508 = vmatprep.subr.mxu0 0.0
      %509 = vmatpush1.msra.mxu0 %v366
      %510 = vmatprep.subr.mxu0 0.0
      %511 = vmatpush1.msra.mxu0 %v361
      %512 = vmatprep.subr.mxu0 0.0
      %513 = vmatpush2.msra.mxu0 0.0
      %514 = vmatprep.subr.mxu0 0.0
      %515 = vmatpush2.msra.mxu0 0.0
      %516 = vmatprep.subr.mxu0 0.0
      %517 = vmatpush2.msra.mxu0 0.0
      %518 = vmatprep.subr.mxu0 0.0
      %519 = vmatpush2.msra.mxu0 0.0
      %520 = vmatprep.subr.mxu0 0.0
      %521 = vmatpush2.msra.mxu0 0.0
      %522 = vmatprep.subr.mxu0 0.0
      %523 = vmatpush2.msra.mxu0 0.0
      %524 = vmatprep.subr.mxu0 0.0
      %525 = vmatpush2.msra.mxu0 0.0
      %526 = vmatprep.subr.mxu0 0.0
      %527 = vmatpush2.msra.mxu0 0.0
      %528 = vmatprep.subr.mxu0 0.0
      %529 = vmatpush2.msra.mxu0 0.0
      %530 = vmatprep.subr.mxu0 0.0
      %531 = vmatpush2.msra.mxu0 0.0
      %532 = vmatprep.subr.mxu0 0.0
      %533 = vmatpush2.msra.mxu0 0.0
      %534 = vmatprep.subr.mxu0 0.0
      %535 = vmatpush2.msra.mxu0 0.0
      %536 = vmatprep.subr.mxu0 0.0
      %537 = vmatpush2.msra.mxu0 0.0
      %538 = vmatprep.subr.mxu0 0.0
      %539 = vmatpush2.msra.mxu0 0.0
      %540 = vmatprep.subr.mxu0 0.0
      %541 = vmatpush2.msra.mxu0 0.0
      %542 = vmatprep.subr.mxu0 0.0
      %543 = vmatpush2.msra.mxu0 0.0
      %544 = vmatprep.mubr.f32.mxu0 0.0
      %545 = vmatmul.mubr.f32.gmra.mxu0 %v475
      %v546 = vpop.f32.mrf.mxu0
      %v547 = vadd.f32 0.0, %v546
      %v548 = vpop.f32.mrf.mxu0
      %549 = vmatprep.mubr.f32.mxu0 0.0
      %550 = vmatmul.mubr.f32.gmra.mxu0 %v478
      %v551 = vpop.f32.mrf.mxu0
      %v552 = vadd.f32 0.0, %v551
      %v553 = vpop.f32.mrf.mxu0
      %554 = vdwg.mxu0
      %v555 = vadd.f32 %v472, %v547
      %v556 = vadd.f32 %v473, %v552
      %s557 = scalar_lea.vmem [#allocation2], %s183
      %558 = vst [vmem:[%s557] sm:$0xff] %v555
      %559 = vst [vmem:[%s557 + $0x8] sm:$0xff] %v556
      %p560 = scmp.eq.s32.totalorder %s15, 1
      // Predicated region
      $region37: #{local_feature_enhancement.1} parent=35 // pred_check
        %p561 = pneg %p560
      $region38: #{local_feature_enhancement.1} parent=35 // pred_check_branch
        %563 = sbr.rel (%p561) target = $region40
      $region39: #{local_feature_enhancement.1} parent=35 // pred_region
        %v564 = vadd.s32 %v370, 16
        %v565 = vadd.s32 %v370, 24
        %v566 = vadd.s32 %v370, 32
        %v567 = vadd.s32 %v370, 40
        %v568 = vadd.s32 %v370, 48
        %v569 = vadd.s32 %v370, 56
        %v570 = vadd.s32 %v370, 64
        %v571 = vadd.s32 %v370, 72
        %v572 = vadd.s32 %v370, 80
        %v573 = vadd.s32 %v370, 88
        %v574 = vadd.s32 %v370, 96
        %v575 = vadd.s32 %v370, 104
        %v576 = vadd.s32 %v370, 112
        %v577 = vadd.s32 %v370, 120
        %vm578 = vcmp.lt.s32.totalorder %v370, 0
        %v579 = vsub.s32 0, %v370
        %v580 = vsel %vm578, %v579, %v370
        %v581 = vshrl.u32 %v580, 3
        %v582 = vand.u32 %v580, 7
        %v583 = vsub.s32 0, %v582
        %v584 = vsel %vm578, %v583, %v582
        %vm585 = vcmp.lt.s32.totalorder %v371, 0
        %v586 = vsub.s32 0, %v371
        %v587 = vsel %vm585, %v586, %v371
        %v588 = vshrl.u32 %v587, 3
        %v589 = vand.u32 %v587, 7
        %v590 = vsub.s32 0, %v589
        %v591 = vsel %vm585, %v590, %v589
        %vm592 = vcmp.lt.s32.totalorder %v564, 0
        %v593 = vsub.s32 0, %v564
        %v594 = vsel %vm592, %v593, %v564
        %v595 = vshrl.u32 %v594, 3
        %v596 = vand.u32 %v594, 7
        %v597 = vsub.s32 0, %v596
        %v598 = vsel %vm592, %v597, %v596
        %vm599 = vcmp.lt.s32.totalorder %v565, 0
        %v600 = vsub.s32 0, %v565
        %v601 = vsel %vm599, %v600, %v565
        %v602 = vshrl.u32 %v601, 3
        %v603 = vand.u32 %v601, 7
        %v604 = vsub.s32 0, %v603
        %v605 = vsel %vm599, %v604, %v603
        %vm606 = vcmp.lt.s32.totalorder %v566, 0
        %v607 = vsub.s32 0, %v566
        %v608 = vsel %vm606, %v607, %v566
        %v609 = vshrl.u32 %v608, 3
        %v610 = vand.u32 %v608, 7
        %v611 = vsub.s32 0, %v610
        %v612 = vsel %vm606, %v611, %v610
        %vm613 = vcmp.lt.s32.totalorder %v567, 0
        %v614 = vsub.s32 0, %v567
        %v615 = vsel %vm613, %v614, %v567
        %v616 = vshrl.u32 %v615, 3
        %v617 = vand.u32 %v615, 7
        %v618 = vsub.s32 0, %v617
        %v619 = vsel %vm613, %v618, %v617
        %vm620 = vcmp.lt.s32.totalorder %v568, 0
        %v621 = vsub.s32 0, %v568
        %v622 = vsel %vm620, %v621, %v568
        %v623 = vshrl.u32 %v622, 3
        %v624 = vand.u32 %v622, 7
        %v625 = vsub.s32 0, %v624
        %v626 = vsel %vm620, %v625, %v624
        %vm627 = vcmp.lt.s32.totalorder %v569, 0
        %v628 = vsub.s32 0, %v569
        %v629 = vsel %vm627, %v628, %v569
        %v630 = vshrl.u32 %v629, 3
        %v631 = vand.u32 %v629, 7
        %v632 = vsub.s32 0, %v631
        %v633 = vsel %vm627, %v632, %v631
        %vm634 = vcmp.lt.s32.totalorder %v570, 0
        %v635 = vsub.s32 0, %v570
        %v636 = vsel %vm634, %v635, %v570
        %v637 = vshrl.u32 %v636, 3
        %v638 = vand.u32 %v636, 7
        %v639 = vsub.s32 0, %v638
        %v640 = vsel %vm634, %v639, %v638
        %vm641 = vcmp.lt.s32.totalorder %v571, 0
        %v642 = vsub.s32 0, %v571
        %v643 = vsel %vm641, %v642, %v571
        %v644 = vshrl.u32 %v643, 3
        %v645 = vand.u32 %v643, 7
        %v646 = vsub.s32 0, %v645
        %v647 = vsel %vm641, %v646, %v645
        %vm648 = vcmp.lt.s32.totalorder %v572, 0
        %v649 = vsub.s32 0, %v572
        %v650 = vsel %vm648, %v649, %v572
        %v651 = vshrl.u32 %v650, 3
        %v652 = vand.u32 %v650, 7
        %v653 = vsub.s32 0, %v652
        %v654 = vsel %vm648, %v653, %v652
        %vm655 = vcmp.lt.s32.totalorder %v573, 0
        %v656 = vsub.s32 0, %v573
        %v657 = vsel %vm655, %v656, %v573
        %v658 = vshrl.u32 %v657, 3
        %v659 = vand.u32 %v657, 7
        %v660 = vsub.s32 0, %v659
        %v661 = vsel %vm655, %v660, %v659
        %vm662 = vcmp.lt.s32.totalorder %v574, 0
        %v663 = vsub.s32 0, %v574
        %v664 = vsel %vm662, %v663, %v574
        %v665 = vshrl.u32 %v664, 3
        %v666 = vand.u32 %v664, 7
        %v667 = vsub.s32 0, %v666
        %v668 = vsel %vm662, %v667, %v666
        %vm669 = vcmp.lt.s32.totalorder %v575, 0
        %v670 = vsub.s32 0, %v575
        %v671 = vsel %vm669, %v670, %v575
        %v672 = vshrl.u32 %v671, 3
        %v673 = vand.u32 %v671, 7
        %v674 = vsub.s32 0, %v673
        %v675 = vsel %vm669, %v674, %v673
        %vm676 = vcmp.lt.s32.totalorder %v576, 0
        %v677 = vsub.s32 0, %v576
        %v678 = vsel %vm676, %v677, %v576
        %v679 = vshrl.u32 %v678, 3
        %v680 = vand.u32 %v678, 7
        %v681 = vsub.s32 0, %v680
        %v682 = vsel %vm676, %v681, %v680
        %vm683 = vcmp.lt.s32.totalorder %v577, 0
        %v684 = vsub.s32 0, %v577
        %v685 = vsel %vm683, %v684, %v577
        %v686 = vshrl.u32 %v685, 3
        %v687 = vand.u32 %v685, 7
        %v688 = vsub.s32 0, %v687
        %v689 = vsel %vm683, %v688, %v687
        %vm690 = vcmp.ne.s32.totalorder %v584, 0
        %vm691 = vcmp.ne.s32.totalorder %v591, 0
        %vm692 = vcmp.ne.s32.totalorder %v598, 0
        %vm693 = vcmp.ne.s32.totalorder %v605, 0
        %vm694 = vcmp.ne.s32.totalorder %v612, 0
        %vm695 = vcmp.ne.s32.totalorder %v619, 0
        %vm696 = vcmp.ne.s32.totalorder %v626, 0
        %vm697 = vcmp.ne.s32.totalorder %v633, 0
        %vm698 = vcmp.ne.s32.totalorder %v640, 0
        %vm699 = vcmp.ne.s32.totalorder %v647, 0
        %vm700 = vcmp.ne.s32.totalorder %v654, 0
        %vm701 = vcmp.ne.s32.totalorder %v661, 0
        %vm702 = vcmp.ne.s32.totalorder %v668, 0
        %vm703 = vcmp.ne.s32.totalorder %v675, 0
        %vm704 = vcmp.ne.s32.totalorder %v682, 0
        %vm705 = vcmp.ne.s32.totalorder %v689, 0
        %vm706 = vcmp.lt.s32.totalorder %v584, 0
        %vm707 = vcmp.lt.s32.totalorder %v591, 0
        %vm708 = vcmp.lt.s32.totalorder %v598, 0
        %vm709 = vcmp.lt.s32.totalorder %v605, 0
        %vm710 = vcmp.lt.s32.totalorder %v612, 0
        %vm711 = vcmp.lt.s32.totalorder %v619, 0
        %vm712 = vcmp.lt.s32.totalorder %v626, 0
        %vm713 = vcmp.lt.s32.totalorder %v633, 0
        %vm714 = vcmp.lt.s32.totalorder %v640, 0
        %vm715 = vcmp.lt.s32.totalorder %v647, 0
        %vm716 = vcmp.lt.s32.totalorder %v654, 0
        %vm717 = vcmp.lt.s32.totalorder %v661, 0
        %vm718 = vcmp.lt.s32.totalorder %v668, 0
        %vm719 = vcmp.lt.s32.totalorder %v675, 0
        %vm720 = vcmp.lt.s32.totalorder %v682, 0
        %vm721 = vcmp.lt.s32.totalorder %v689, 0
        %vm722 = vmand %vm706, %vm690
        %vm723 = vmand %vm707, %vm691
        %vm724 = vmand %vm708, %vm692
        %vm725 = vmand %vm709, %vm693
        %vm726 = vmand %vm710, %vm694
        %vm727 = vmand %vm711, %vm695
        %vm728 = vmand %vm712, %vm696
        %vm729 = vmand %vm713, %vm697
        %vm730 = vmand %vm714, %vm698
        %vm731 = vmand %vm715, %vm699
        %vm732 = vmand %vm716, %vm700
        %vm733 = vmand %vm717, %vm701
        %vm734 = vmand %vm718, %vm702
        %vm735 = vmand %vm719, %vm703
        %vm736 = vmand %vm720, %vm704
        %vm737 = vmand %vm721, %vm705
        %v738 = vadd.s32 %v584, 8
        %v739 = vadd.s32 %v591, 8
        %v740 = vadd.s32 %v598, 8
        %v741 = vadd.s32 %v605, 8
        %v742 = vadd.s32 %v612, 8
        %v743 = vadd.s32 %v619, 8
        %v744 = vadd.s32 %v626, 8
        %v745 = vadd.s32 %v633, 8
        %v746 = vadd.s32 %v640, 8
        %v747 = vadd.s32 %v647, 8
        %v748 = vadd.s32 %v654, 8
        %v749 = vadd.s32 %v661, 8
        %v750 = vadd.s32 %v668, 8
        %v751 = vadd.s32 %v675, 8
        %v752 = vadd.s32 %v682, 8
        %v753 = vadd.s32 %v689, 8
        %v754 = vsel %vm722, %v738, %v584
        %v755 = vsel %vm723, %v739, %v591
        %v756 = vsel %vm724, %v740, %v598
        %v757 = vsel %vm725, %v741, %v605
        %v758 = vsel %vm726, %v742, %v612
        %v759 = vsel %vm727, %v743, %v619
        %v760 = vsel %vm728, %v744, %v626
        %v761 = vsel %vm729, %v745, %v633
        %v762 = vsel %vm730, %v746, %v640
        %v763 = vsel %vm731, %v747, %v647
        %v764 = vsel %vm732, %v748, %v654
        %v765 = vsel %vm733, %v749, %v661
        %v766 = vsel %vm734, %v750, %v668
        %v767 = vsel %vm735, %v751, %v675
        %v768 = vsel %vm736, %v752, %v682
        %v769 = vsel %vm737, %v753, %v689
        %vm770 = vcmp.eq.s32.totalorder %v754, %v373
        %vm771 = vcmp.eq.s32.totalorder %v755, %v373
        %vm772 = vcmp.eq.s32.totalorder %v756, %v373
        %vm773 = vcmp.eq.s32.totalorder %v757, %v373
        %vm774 = vcmp.eq.s32.totalorder %v758, %v373
        %vm775 = vcmp.eq.s32.totalorder %v759, %v373
        %vm776 = vcmp.eq.s32.totalorder %v760, %v373
        %vm777 = vcmp.eq.s32.totalorder %v761, %v373
        %vm778 = vcmp.eq.s32.totalorder %v762, %v373
        %vm779 = vcmp.eq.s32.totalorder %v763, %v373
        %vm780 = vcmp.eq.s32.totalorder %v764, %v373
        %vm781 = vcmp.eq.s32.totalorder %v765, %v373
        %vm782 = vcmp.eq.s32.totalorder %v766, %v373
        %vm783 = vcmp.eq.s32.totalorder %v767, %v373
        %vm784 = vcmp.eq.s32.totalorder %v768, %v373
        %vm785 = vcmp.eq.s32.totalorder %v769, %v373
        %v786 = vsel %vm770, 1, 0
        %v787 = vsel %vm771, 1, 0
        %v788 = vsel %vm772, 1, 0
        %v789 = vsel %vm773, 1, 0
        %v790 = vsel %vm774, 1, 0
        %v791 = vsel %vm775, 1, 0
        %v792 = vsel %vm776, 1, 0
        %v793 = vsel %vm777, 1, 0
        %v794 = vsel %vm778, 1, 0
        %v795 = vsel %vm779, 1, 0
        %v796 = vsel %vm780, 1, 0
        %v797 = vsel %vm781, 1, 0
        %v798 = vsel %vm782, 1, 0
        %v799 = vsel %vm783, 1, 0
        %v800 = vsel %vm784, 1, 0
        %v801 = vsel %vm785, 1, 0
        %v802 = vcvt.s32.f32 %v786
        %v803 = vcvt.s32.f32 %v787
        %v804 = vcvt.s32.f32 %v788
        %v805 = vcvt.s32.f32 %v789
        %v806 = vcvt.s32.f32 %v790
        %v807 = vcvt.s32.f32 %v791
        %v808 = vcvt.s32.f32 %v792
        %v809 = vcvt.s32.f32 %v793
        %v810 = vcvt.s32.f32 %v794
        %v811 = vcvt.s32.f32 %v795
        %v812 = vcvt.s32.f32 %v796
        %v813 = vcvt.s32.f32 %v797
        %v814 = vcvt.s32.f32 %v798
        %v815 = vcvt.s32.f32 %v799
        %v816 = vcvt.s32.f32 %v800
        %v817 = vcvt.s32.f32 %v801
        %vm818 = vcmp.lt.s32.totalorder %v373, 0
        %v819 = vsub.s32 0, %v373
        %v820 = vsel %vm818, %v819, %v373
        %v821 = vshrl.u32 %v820, 3
        %v822 = vand.u32 %v820, 7
        %v823 = vsub.s32 0, %v822
        %v824 = vsel %vm818, %v823, %v822
        %vm825 = vcmp.ne.s32.totalorder %v824, 0
        %vm826 = vcmp.lt.s32.totalorder %v824, 0
        %vm827 = vmand %vm826, %vm825
        %v828 = vadd.s32 %v824, 8
        %v829 = vsel %vm827, %v828, %v824
        %vm830 = vcmp.eq.s32.totalorder %v829, %v370
        %v831 = vsel %vm830, 1, 0
        %v832 = vcvt.s32.f32 %v831
        %v833 = vld [vmem:[#allocation2] sm:$0xff]
        %v834 = vld [vmem:[#allocation2 + $0x8] sm:$0xff]
        %v835 = vld [vmem:[#allocation2 + $0x10] sm:$0xff]
        %v836 = vld [vmem:[#allocation2 + $0x18] sm:$0xff]
        %v837 = vld [vmem:[%s3] sm:$0x1]
        %v838 = vld [vmem:[%s3 + $0x1] sm:$0x1]
        %v839 = vadd.f32 %v833, %v834
        %v840 = vadd.f32 %v839, %v835
        %v841 = vadd.f32 %v840, %v836
        %v842 = vrot.slane %v841, 4
        %v843 = vadd.f32 %v841, %v842
        %v844 = vrot.slane %v843, 2
        %v845 = vadd.f32 %v843, %v844
        %v846 = vrot.slane %v845, 1
        %v847 = vadd.f32 %v845, %v846
        %848 = vmatprep.subr.mxu0 0.0
        %849 = vmatpush1.msra.mxu0 %v817
        %850 = vmatprep.subr.mxu0 0.0
        %851 = vmatpush1.msra.mxu0 %v816
        %852 = vmatprep.subr.mxu0 0.0
        %853 = vmatpush1.msra.mxu0 %v815
        %854 = vmatprep.subr.mxu0 0.0
        %855 = vmatpush1.msra.mxu0 %v814
        %856 = vmatprep.subr.mxu0 0.0
        %857 = vmatpush1.msra.mxu0 %v813
        %858 = vmatprep.subr.mxu0 0.0
        %859 = vmatpush1.msra.mxu0 %v812
        %860 = vmatprep.subr.mxu0 0.0
        %861 = vmatpush1.msra.mxu0 %v811
        %862 = vmatprep.subr.mxu0 0.0
        %863 = vmatpush1.msra.mxu0 %v810
        %864 = vmatprep.subr.mxu0 0.0
        %865 = vmatpush1.msra.mxu0 %v809
        %866 = vmatprep.subr.mxu0 0.0
        %867 = vmatpush1.msra.mxu0 %v808
        %868 = vmatprep.subr.mxu0 0.0
        %869 = vmatpush1.msra.mxu0 %v807
        %870 = vmatprep.subr.mxu0 0.0
        %871 = vmatpush1.msra.mxu0 %v806
        %872 = vmatprep.subr.mxu0 0.0
        %873 = vmatpush1.msra.mxu0 %v805
        %874 = vmatprep.subr.mxu0 0.0
        %875 = vmatpush1.msra.mxu0 %v804
        %876 = vmatprep.subr.mxu0 0.0
        %877 = vmatpush1.msra.mxu0 %v803
        %878 = vmatprep.subr.mxu0 0.0
        %879 = vmatpush1.msra.mxu0 %v802
        %880 = vmatprep.subr.mxu0 0.0
        %881 = vmatpush2.msra.mxu0 0.0
        %882 = vmatprep.subr.mxu0 0.0
        %883 = vmatpush2.msra.mxu0 0.0
        %884 = vmatprep.subr.mxu0 0.0
        %885 = vmatpush2.msra.mxu0 0.0
        %886 = vmatprep.subr.mxu0 0.0
        %887 = vmatpush2.msra.mxu0 0.0
        %888 = vmatprep.subr.mxu0 0.0
        %889 = vmatpush2.msra.mxu0 0.0
        %890 = vmatprep.subr.mxu0 0.0
        %891 = vmatpush2.msra.mxu0 0.0
        %892 = vmatprep.subr.mxu0 0.0
        %893 = vmatpush2.msra.mxu0 0.0
        %894 = vmatprep.subr.mxu0 0.0
        %895 = vmatpush2.msra.mxu0 0.0
        %896 = vmatprep.subr.mxu0 0.0
        %897 = vmatpush2.msra.mxu0 0.0
        %898 = vmatprep.subr.mxu0 0.0
        %899 = vmatpush2.msra.mxu0 0.0
        %900 = vmatprep.subr.mxu0 0.0
        %901 = vmatpush2.msra.mxu0 0.0
        %902 = vmatprep.subr.mxu0 0.0
        %903 = vmatpush2.msra.mxu0 0.0
        %904 = vmatprep.subr.mxu0 0.0
        %905 = vmatpush2.msra.mxu0 0.0
        %906 = vmatprep.subr.mxu0 0.0
        %907 = vmatpush2.msra.mxu0 0.0
        %908 = vmatprep.subr.mxu0 0.0
        %909 = vmatpush2.msra.mxu0 0.0
        %910 = vmatprep.subr.mxu0 0.0
        %911 = vmatpush2.msra.mxu0 0.0
        %912 = vmatprep.mubr.f32.mxu0 0.0
        %913 = vmatmul.mubr.f32.gmra.mxu0 %v847
        %v914 = vpop.f32.mrf.mxu0
        %v915 = vadd.f32 0.0, %v914
        %v916 = vpop.f32.mrf.mxu0
        %917 = vdwg.mxu0
        %v918 = vmul.f32 %v915, 0.001953125
        %vm919 = vcmask 64512
        %v921 = vsel %vm919, %v918, 0
        %923 = vmatprep.subr.mxu0 0.0
        %924 = vmatpush1.msra.mxu0 0.0
        %925 = vmatprep.subr.mxu0 0.0
        %926 = vmatpush1.msra.mxu0 0.0
        %927 = vmatprep.subr.mxu0 0.0
        %928 = vmatpush1.msra.mxu0 0.0
        %929 = vmatprep.subr.mxu0 0.0
        %930 = vmatpush1.msra.mxu0 0.0
        %931 = vmatprep.subr.mxu0 0.0
        %932 = vmatpush1.msra.mxu0 0.0
        %933 = vmatprep.subr.mxu0 0.0
        %934 = vmatpush1.msra.mxu0 0.0
        %935 = vmatprep.subr.mxu0 0.0
        %936 = vmatpush1.msra.mxu0 0.0
        %937 = vmatprep.subr.mxu0 0.0
        %938 = vmatpush1.msra.mxu0 0.0
        %939 = vmatprep.subr.mxu0 0.0
        %940 = vmatpush1.msra.mxu0 0.0
        %941 = vmatprep.subr.mxu0 0.0
        %942 = vmatpush1.msra.mxu0 0.0
        %943 = vmatprep.subr.mxu0 0.0
        %944 = vmatpush1.msra.mxu0 0.0
        %945 = vmatprep.subr.mxu0 0.0
        %946 = vmatpush1.msra.mxu0 0.0
        %947 = vmatprep.subr.mxu0 0.0
        %948 = vmatpush1.msra.mxu0 0.0
        %949 = vmatprep.subr.mxu0 0.0
        %950 = vmatpush1.msra.mxu0 0.0
        %951 = vmatprep.subr.mxu0 0.0
        %952 = vmatpush1.msra.mxu0 0.0
        %953 = vmatprep.subr.mxu0 0.0
        %954 = vmatpush1.msra.mxu0 %v832
        %955 = vmatprep.subr.mxu0 0.0
        %956 = vmatpush2.msra.mxu0 0.0
        %957 = vmatprep.subr.mxu0 0.0
        %958 = vmatpush2.msra.mxu0 0.0
        %959 = vmatprep.subr.mxu0 0.0
        %960 = vmatpush2.msra.mxu0 0.0
        %961 = vmatprep.subr.mxu0 0.0
        %962 = vmatpush2.msra.mxu0 0.0
        %963 = vmatprep.subr.mxu0 0.0
        %964 = vmatpush2.msra.mxu0 0.0
        %965 = vmatprep.subr.mxu0 0.0
        %966 = vmatpush2.msra.mxu0 0.0
        %967 = vmatprep.subr.mxu0 0.0
        %968 = vmatpush2.msra.mxu0 0.0
        %969 = vmatprep.subr.mxu0 0.0
        %970 = vmatpush2.msra.mxu0 0.0
        %971 = vmatprep.subr.mxu0 0.0
        %972 = vmatpush2.msra.mxu0 0.0
        %973 = vmatprep.subr.mxu0 0.0
        %974 = vmatpush2.msra.mxu0 0.0
        %975 = vmatprep.subr.mxu0 0.0
        %976 = vmatpush2.msra.mxu0 0.0
        %977 = vmatprep.subr.mxu0 0.0
        %978 = vmatpush2.msra.mxu0 0.0
        %979 = vmatprep.subr.mxu0 0.0
        %980 = vmatpush2.msra.mxu0 0.0
        %981 = vmatprep.subr.mxu0 0.0
        %982 = vmatpush2.msra.mxu0 0.0
        %983 = vmatprep.subr.mxu0 0.0
        %984 = vmatpush2.msra.mxu0 0.0
        %985 = vmatprep.subr.mxu0 0.0
        %986 = vmatpush2.msra.mxu0 0.0
        %987 = vmatprep.mubr.f32.mxu0 0.0
        %988 = vmatmul.mubr.f32.gmra.mxu0 %v921
        %v989 = vpop.f32.mrf.mxu0
        %v990 = vadd.f32 0.0, %v989
        %v991 = vpop.f32.mrf.mxu0
        %992 = vdwg.mxu0
        %v993 = vlaneseq
        %v994 = vshrl.u32 %v993, 7
        %v995 = vsub.s32 0, %v994
        %v996 = vrot.slane %v990, %v995
        %v997 = vsub.f32 %v833, %v996
        %v998 = vsub.f32 %v834, %v996
        %v999 = vsub.f32 %v835, %v996
        %v1000 = vsub.f32 %v836, %v996
        %v1001 = vmul.f32 %v997, %v997
        %v1002 = vmul.f32 %v998, %v998
        %v1003 = vmul.f32 %v999, %v999
        %v1004 = vmul.f32 %v1000, %v1000
        %v1005 = vadd.f32 %v1001, %v1002
        %v1006 = vadd.f32 %v1005, %v1003
        %v1007 = vadd.f32 %v1006, %v1004
        %v1008 = vrot.slane %v1007, 4
        %v1009 = vadd.f32 %v1007, %v1008
        %v1010 = vrot.slane %v1009, 2
        %v1011 = vadd.f32 %v1009, %v1010
        %v1012 = vrot.slane %v1011, 1
        %v1013 = vadd.f32 %v1011, %v1012
        %1014 = vmatprep.subr.mxu0 0.0
        %1015 = vmatpush1.msra.mxu0 %v817
        %1016 = vmatprep.subr.mxu0 0.0
        %1017 = vmatpush1.msra.mxu0 %v816
        %1018 = vmatprep.subr.mxu0 0.0
        %1019 = vmatpush1.msra.mxu0 %v815
        %1020 = vmatprep.subr.mxu0 0.0
        %1021 = vmatpush1.msra.mxu0 %v814
        %1022 = vmatprep.subr.mxu0 0.0
        %1023 = vmatpush1.msra.mxu0 %v813
        %1024 = vmatprep.subr.mxu0 0.0
        %1025 = vmatpush1.msra.mxu0 %v812
        %1026 = vmatprep.subr.mxu0 0.0
        %1027 = vmatpush1.msra.mxu0 %v811
        %1028 = vmatprep.subr.mxu0 0.0
        %1029 = vmatpush1.msra.mxu0 %v810
        %1030 = vmatprep.subr.mxu0 0.0
        %1031 = vmatpush1.msra.mxu0 %v809
        %1032 = vmatprep.subr.mxu0 0.0
        %1033 = vmatpush1.msra.mxu0 %v808
        %1034 = vmatprep.subr.mxu0 0.0
        %1035 = vmatpush1.msra.mxu0 %v807
        %1036 = vmatprep.subr.mxu0 0.0
        %1037 = vmatpush1.msra.mxu0 %v806
        %1038 = vmatprep.subr.mxu0 0.0
        %1039 = vmatpush1.msra.mxu0 %v805
        %1040 = vmatprep.subr.mxu0 0.0
        %1041 = vmatpush1.msra.mxu0 %v804
        %1042 = vmatprep.subr.mxu0 0.0
        %1043 = vmatpush1.msra.mxu0 %v803
        %1044 = vmatprep.subr.mxu0 0.0
        %1045 = vmatpush1.msra.mxu0 %v802
        %1046 = vmatprep.subr.mxu0 0.0
        %1047 = vmatpush2.msra.mxu0 0.0
        %1048 = vmatprep.subr.mxu0 0.0
        %1049 = vmatpush2.msra.mxu0 0.0
        %1050 = vmatprep.subr.mxu0 0.0
        %1051 = vmatpush2.msra.mxu0 0.0
        %1052 = vmatprep.subr.mxu0 0.0
        %1053 = vmatpush2.msra.mxu0 0.0
        %1054 = vmatprep.subr.mxu0 0.0
        %1055 = vmatpush2.msra.mxu0 0.0
        %1056 = vmatprep.subr.mxu0 0.0
        %1057 = vmatpush2.msra.mxu0 0.0
        %1058 = vmatprep.subr.mxu0 0.0
        %1059 = vmatpush2.msra.mxu0 0.0
        %1060 = vmatprep.subr.mxu0 0.0
        %1061 = vmatpush2.msra.mxu0 0.0
        %1062 = vmatprep.subr.mxu0 0.0
        %1063 = vmatpush2.msra.mxu0 0.0
        %1064 = vmatprep.subr.mxu0 0.0
        %1065 = vmatpush2.msra.mxu0 0.0
        %1066 = vmatprep.subr.mxu0 0.0
        %1067 = vmatpush2.msra.mxu0 0.0
        %1068 = vmatprep.subr.mxu0 0.0
        %1069 = vmatpush2.msra.mxu0 0.0
        %1070 = vmatprep.subr.mxu0 0.0
        %1071 = vmatpush2.msra.mxu0 0.0
        %1072 = vmatprep.subr.mxu0 0.0
        %1073 = vmatpush2.msra.mxu0 0.0
        %1074 = vmatprep.subr.mxu0 0.0
        %1075 = vmatpush2.msra.mxu0 0.0
        %1076 = vmatprep.subr.mxu0 0.0
        %1077 = vmatpush2.msra.mxu0 0.0
        %1078 = vmatprep.mubr.f32.mxu0 0.0
        %1079 = vmatmul.mubr.f32.gmra.mxu0 %v1013
        %v1080 = vpop.f32.mrf.mxu0
        %v1081 = vadd.f32 0.0, %v1080
        %v1082 = vpop.f32.mrf.mxu0
        %1083 = vdwg.mxu0
        %v1084 = vmul.f32 %v1081, 0.001953125
        %v1085 = vadd.f32 %v1084, 1e-05
        %v1086 = vrsqrt.pop %v1085
        %v1088 = vsel %vm919, %v1086, 0
        %1090 = vmatprep.subr.mxu0 0.0
        %1091 = vmatpush1.msra.mxu0 0.0
        %1092 = vmatprep.subr.mxu0 0.0
        %1093 = vmatpush1.msra.mxu0 0.0
        %1094 = vmatprep.subr.mxu0 0.0
        %1095 = vmatpush1.msra.mxu0 0.0
        %1096 = vmatprep.subr.mxu0 0.0
        %1097 = vmatpush1.msra.mxu0 0.0
        %1098 = vmatprep.subr.mxu0 0.0
        %1099 = vmatpush1.msra.mxu0 0.0
        %1100 = vmatprep.subr.mxu0 0.0
        %1101 = vmatpush1.msra.mxu0 0.0
        %1102 = vmatprep.subr.mxu0 0.0
        %1103 = vmatpush1.msra.mxu0 0.0
        %1104 = vmatprep.subr.mxu0 0.0
        %1105 = vmatpush1.msra.mxu0 0.0
        %1106 = vmatprep.subr.mxu0 0.0
        %1107 = vmatpush1.msra.mxu0 0.0
        %1108 = vmatprep.subr.mxu0 0.0
        %1109 = vmatpush1.msra.mxu0 0.0
        %1110 = vmatprep.subr.mxu0 0.0
        %1111 = vmatpush1.msra.mxu0 0.0
        %1112 = vmatprep.subr.mxu0 0.0
        %1113 = vmatpush1.msra.mxu0 0.0
        %1114 = vmatprep.subr.mxu0 0.0
        %1115 = vmatpush1.msra.mxu0 0.0
        %1116 = vmatprep.subr.mxu0 0.0
        %1117 = vmatpush1.msra.mxu0 0.0
        %1118 = vmatprep.subr.mxu0 0.0
        %1119 = vmatpush1.msra.mxu0 0.0
        %1120 = vmatprep.subr.mxu0 0.0
        %1121 = vmatpush1.msra.mxu0 %v832
        %1122 = vmatprep.subr.mxu0 0.0
        %1123 = vmatpush2.msra.mxu0 0.0
        %1124 = vmatprep.subr.mxu0 0.0
        %1125 = vmatpush2.msra.mxu0 0.0
        %1126 = vmatprep.subr.mxu0 0.0
        %1127 = vmatpush2.msra.mxu0 0.0
        %1128 = vmatprep.subr.mxu0 0.0
        %1129 = vmatpush2.msra.mxu0 0.0
        %1130 = vmatprep.subr.mxu0 0.0
        %1131 = vmatpush2.msra.mxu0 0.0
        %1132 = vmatprep.subr.mxu0 0.0
        %1133 = vmatpush2.msra.mxu0 0.0
        %1134 = vmatprep.subr.mxu0 0.0
        %1135 = vmatpush2.msra.mxu0 0.0
        %1136 = vmatprep.subr.mxu0 0.0
        %1137 = vmatpush2.msra.mxu0 0.0
        %1138 = vmatprep.subr.mxu0 0.0
        %1139 = vmatpush2.msra.mxu0 0.0
        %1140 = vmatprep.subr.mxu0 0.0
        %1141 = vmatpush2.msra.mxu0 0.0
        %1142 = vmatprep.subr.mxu0 0.0
        %1143 = vmatpush2.msra.mxu0 0.0
        %1144 = vmatprep.subr.mxu0 0.0
        %1145 = vmatpush2.msra.mxu0 0.0
        %1146 = vmatprep.subr.mxu0 0.0
        %1147 = vmatpush2.msra.mxu0 0.0
        %1148 = vmatprep.subr.mxu0 0.0
        %1149 = vmatpush2.msra.mxu0 0.0
        %1150 = vmatprep.subr.mxu0 0.0
        %1151 = vmatpush2.msra.mxu0 0.0
        %1152 = vmatprep.subr.mxu0 0.0
        %1153 = vmatpush2.msra.mxu0 0.0
        %1154 = vmatprep.mubr.f32.mxu0 0.0
        %1155 = vmatmul.mubr.f32.gmra.mxu0 %v1088
        %v1156 = vpop.f32.mrf.mxu0
        %v1157 = vadd.f32 0.0, %v1156
        %v1158 = vpop.f32.mrf.mxu0
        %1159 = vdwg.mxu0
        %v1160 = vmul.f32 %v1157, %v837
        %v1161 = vlaneseq
        %v1162 = vshrl.u32 %v1161, 7
        %v1163 = vsub.s32 0, %v1162
        %v1164 = vrot.slane %v1160, %v1163
        %v1165 = vmul.f32 %v997, %v1164
        %v1166 = vmul.f32 %v998, %v1164
        %v1167 = vmul.f32 %v999, %v1164
        %v1168 = vmul.f32 %v1000, %v1164
        %v1169 = vlaneseq
        %v1170 = vshrl.u32 %v1169, 7
        %v1171 = vsub.s32 0, %v1170
        %v1172 = vrot.slane %v838, %v1171
        %v1173 = vadd.f32 %v1165, %v1172
        %v1174 = vadd.f32 %v1166, %v1172
        %v1175 = vadd.f32 %v1167, %v1172
        %v1176 = vadd.f32 %v1168, %v1172
        %v1177 = vmax.f32 %v1173, 0.0
        %v1178 = vmax.f32 %v1174, 0.0
        %v1179 = vmax.f32 %v1175, 0.0
        %v1180 = vmax.f32 %v1176, 0.0
        %v1181 = vld [vmem:[%s2] sm:$0xff]
        %v1182 = vld [vmem:[%s2 + $0x8] sm:$0xff]
        %v1183 = vld [vmem:[%s2 + $0x10] sm:$0xff]
        %v1184 = vld [vmem:[%s2 + $0x18] sm:$0xff]
        %v1185 = vld [vmem:[%s2 + $0x20] sm:$0xff]
        %v1186 = vld [vmem:[%s2 + $0x28] sm:$0xff]
        %v1187 = vld [vmem:[%s2 + $0x30] sm:$0xff]
        %v1188 = vld [vmem:[%s2 + $0x38] sm:$0xff]
        %v1189 = vld [vmem:[%s2 + $0x40] sm:$0xff]
        %v1190 = vld [vmem:[%s2 + $0x48] sm:$0xff]
        %v1191 = vld [vmem:[%s2 + $0x50] sm:$0xff]
        %v1192 = vld [vmem:[%s2 + $0x58] sm:$0xff]
        %v1193 = vld [vmem:[%s2 + $0x60] sm:$0xff]
        %v1194 = vld [vmem:[%s2 + $0x68] sm:$0xff]
        %v1195 = vld [vmem:[%s2 + $0x70] sm:$0xff]
        %v1196 = vld [vmem:[%s2 + $0x78] sm:$0xff]
        %v1197 = vld [vmem:[%s2 + $0x80] sm:$0xff]
        %v1198 = vld [vmem:[%s2 + $0x88] sm:$0xff]
        %v1199 = vld [vmem:[%s2 + $0x90] sm:$0xff]
        %v1200 = vld [vmem:[%s2 + $0x98] sm:$0xff]
        %v1201 = vld [vmem:[%s2 + $0xa0] sm:$0xff]
        %v1202 = vld [vmem:[%s2 + $0xa8] sm:$0xff]
        %v1203 = vld [vmem:[%s2 + $0xb0] sm:$0xff]
        %v1204 = vld [vmem:[%s2 + $0xb8] sm:$0xff]
        %v1205 = vld [vmem:[%s2 + $0xc0] sm:$0xff]
        %v1206 = vld [vmem:[%s2 + $0xc8] sm:$0xff]
        %v1207 = vld [vmem:[%s2 + $0xd0] sm:$0xff]
        %v1208 = vld [vmem:[%s2 + $0xd8] sm:$0xff]
        %v1209 = vld [vmem:[%s2 + $0xe0] sm:$0xff]
        %v1210 = vld [vmem:[%s2 + $0xe8] sm:$0xff]
        %v1211 = vld [vmem:[%s2 + $0xf0] sm:$0xff]
        %v1212 = vld [vmem:[%s2 + $0xf8] sm:$0xff]
        %v1213 = vld [vmem:[%s2 + $0x100] sm:$0xff]
        %v1214 = vld [vmem:[%s2 + $0x108] sm:$0xff]
        %v1215 = vld [vmem:[%s2 + $0x110] sm:$0xff]
        %v1216 = vld [vmem:[%s2 + $0x118] sm:$0xff]
        %v1217 = vld [vmem:[%s2 + $0x120] sm:$0xff]
        %v1218 = vld [vmem:[%s2 + $0x128] sm:$0xff]
        %v1219 = vld [vmem:[%s2 + $0x130] sm:$0xff]
        %v1220 = vld [vmem:[%s2 + $0x138] sm:$0xff]
        %v1221 = vld [vmem:[%s2 + $0x140] sm:$0xff]
        %v1222 = vld [vmem:[%s2 + $0x148] sm:$0xff]
        %v1223 = vld [vmem:[%s2 + $0x150] sm:$0xff]
        %v1224 = vld [vmem:[%s2 + $0x158] sm:$0xff]
        %v1225 = vld [vmem:[%s2 + $0x160] sm:$0xff]
        %v1226 = vld [vmem:[%s2 + $0x168] sm:$0xff]
        %v1227 = vld [vmem:[%s2 + $0x170] sm:$0xff]
        %v1228 = vld [vmem:[%s2 + $0x178] sm:$0xff]
        %1229 = vmatprep.subr.mxu0 %v1227
        %1230 = vmatpush1.msra.mxu0 %v1226
        %1231 = vmatprep.subr.mxu0 %v1224
        %1232 = vmatpush1.msra.mxu0 %v1223
        %1233 = vmatprep.subr.mxu0 %v1221
        %1234 = vmatpush1.msra.mxu0 %v1220
        %1235 = vmatprep.subr.mxu0 %v1218
        %1236 = vmatpush1.msra.mxu0 %v1217
        %1237 = vmatprep.subr.mxu0 %v1215
        %1238 = vmatpush1.msra.mxu0 %v1214
        %1239 = vmatprep.subr.mxu0 %v1212
        %1240 = vmatpush1.msra.mxu0 %v1211
        %1241 = vmatprep.subr.mxu0 %v1209
        %1242 = vmatpush1.msra.mxu0 %v1208
        %1243 = vmatprep.subr.mxu0 %v1206
        %1244 = vmatpush1.msra.mxu0 %v1205
        %1245 = vmatprep.subr.mxu0 %v1203
        %1246 = vmatpush1.msra.mxu0 %v1202
        %1247 = vmatprep.subr.mxu0 %v1200
        %1248 = vmatpush1.msra.mxu0 %v1199
        %1249 = vmatprep.subr.mxu0 %v1197
        %1250 = vmatpush1.msra.mxu0 %v1196
        %1251 = vmatprep.subr.mxu0 %v1194
        %1252 = vmatpush1.msra.mxu0 %v1193
        %1253 = vmatprep.subr.mxu0 %v1191
        %1254 = vmatpush1.msra.mxu0 %v1190
        %1255 = vmatprep.subr.mxu0 %v1188
        %1256 = vmatpush1.msra.mxu0 %v1187
        %1257 = vmatprep.subr.mxu0 %v1185
        %1258 = vmatpush1.msra.mxu0 %v1184
        %1259 = vmatprep.subr.mxu0 %v1182
        %1260 = vmatpush1.msra.mxu0 %v1181
        %1261 = vmatprep.subr.mxu0 0.0
        %1262 = vmatpush2.msra.mxu0 0.0
        %1263 = vmatprep.subr.mxu0 0.0
        %1264 = vmatpush2.msra.mxu0 0.0
        %1265 = vmatprep.subr.mxu0 0.0
        %1266 = vmatpush2.msra.mxu0 0.0
        %1267 = vmatprep.subr.mxu0 0.0
        %1268 = vmatpush2.msra.mxu0 0.0
        %1269 = vmatprep.subr.mxu0 0.0
        %1270 = vmatpush2.msra.mxu0 0.0
        %1271 = vmatprep.subr.mxu0 0.0
        %1272 = vmatpush2.msra.mxu0 0.0
        %1273 = vmatprep.subr.mxu0 0.0
        %1274 = vmatpush2.msra.mxu0 0.0
        %1275 = vmatprep.subr.mxu0 0.0
        %1276 = vmatpush2.msra.mxu0 0.0
        %1277 = vmatprep.subr.mxu0 0.0
        %1278 = vmatpush2.msra.mxu0 0.0
        %1279 = vmatprep.subr.mxu0 0.0
        %1280 = vmatpush2.msra.mxu0 0.0
        %1281 = vmatprep.subr.mxu0 0.0
        %1282 = vmatpush2.msra.mxu0 0.0
        %1283 = vmatprep.subr.mxu0 0.0
        %1284 = vmatpush2.msra.mxu0 0.0
        %1285 = vmatprep.subr.mxu0 0.0
        %1286 = vmatpush2.msra.mxu0 0.0
        %1287 = vmatprep.subr.mxu0 0.0
        %1288 = vmatpush2.msra.mxu0 0.0
        %1289 = vmatprep.subr.mxu0 0.0
        %1290 = vmatpush2.msra.mxu0 0.0
        %1291 = vmatprep.subr.mxu0 0.0
        %1292 = vmatpush2.msra.mxu0 0.0
        %1293 = vmatprep.mubr.f32.mxu0 0.0
        %1294 = vmatmul.mubr.f32.gmra.mxu0 %v1177
        %v1295 = vpop.f32.mrf.mxu0
        %v1296 = vadd.f32 0.0, %v1295
        %v1297 = vpop.f32.mrf.mxu0
        %v1298 = vadd.f32 0.0, %v1297
        %1299 = vmatprep.mubr.f32.mxu0 0.0
        %1300 = vmatmul.mubr.f32.gmra.mxu0 %v1178
        %v1301 = vpop.f32.mrf.mxu0
        %v1302 = vadd.f32 0.0, %v1301
        %v1303 = vpop.f32.mrf.mxu0
        %v1304 = vadd.f32 0.0, %v1303
        %1305 = vmatprep.mubr.f32.mxu0 0.0
        %1306 = vmatmul.mubr.f32.gmra.mxu0 %v1179
        %v1307 = vpop.f32.mrf.mxu0
        %v1308 = vadd.f32 0.0, %v1307
        %v1309 = vpop.f32.mrf.mxu0
        %v1310 = vadd.f32 0.0, %v1309
        %1311 = vmatprep.mubr.f32.mxu0 0.0
        %1312 = vmatmul.mubr.f32.gmra.mxu0 %v1180
        %v1313 = vpop.f32.mrf.mxu0
        %v1314 = vadd.f32 0.0, %v1313
        %v1315 = vpop.f32.mrf.mxu0
        %v1316 = vadd.f32 0.0, %v1315
        %1317 = vdwg.mxu0
        %1318 = vmatprep.subr.mxu0 0.0
        %1319 = vmatpush1.msra.mxu0 %v1228
        %1320 = vmatprep.subr.mxu0 0.0
        %1321 = vmatpush1.msra.mxu0 %v1225
        %1322 = vmatprep.subr.mxu0 0.0
        %1323 = vmatpush1.msra.mxu0 %v1222
        %1324 = vmatprep.subr.mxu0 0.0
        %1325 = vmatpush1.msra.mxu0 %v1219
        %1326 = vmatprep.subr.mxu0 0.0
        %1327 = vmatpush1.msra.mxu0 %v1216
        %1328 = vmatprep.subr.mxu0 0.0
        %1329 = vmatpush1.msra.mxu0 %v1213
        %1330 = vmatprep.subr.mxu0 0.0
        %1331 = vmatpush1.msra.mxu0 %v1210
        %1332 = vmatprep.subr.mxu0 0.0
        %1333 = vmatpush1.msra.mxu0 %v1207
        %1334 = vmatprep.subr.mxu0 0.0
        %1335 = vmatpush1.msra.mxu0 %v1204
        %1336 = vmatprep.subr.mxu0 0.0
        %1337 = vmatpush1.msra.mxu0 %v1201
        %1338 = vmatprep.subr.mxu0 0.0
        %1339 = vmatpush1.msra.mxu0 %v1198
        %1340 = vmatprep.subr.mxu0 0.0
        %1341 = vmatpush1.msra.mxu0 %v1195
        %1342 = vmatprep.subr.mxu0 0.0
        %1343 = vmatpush1.msra.mxu0 %v1192
        %1344 = vmatprep.subr.mxu0 0.0
        %1345 = vmatpush1.msra.mxu0 %v1189
        %1346 = vmatprep.subr.mxu0 0.0
        %1347 = vmatpush1.msra.mxu0 %v1186
        %1348 = vmatprep.subr.mxu0 0.0
        %1349 = vmatpush1.msra.mxu0 %v1183
        %1350 = vmatprep.subr.mxu0 0.0
        %1351 = vmatpush2.msra.mxu0 0.0
        %1352 = vmatprep.subr.mxu0 0.0
        %1353 = vmatpush2.msra.mxu0 0.0
        %1354 = vmatprep.subr.mxu0 0.0
        %1355 = vmatpush2.msra.mxu0 0.0
        %1356 = vmatprep.subr.mxu0 0.0
        %1357 = vmatpush2.msra.mxu0 0.0
        %1358 = vmatprep.subr.mxu0 0.0
        %1359 = vmatpush2.msra.mxu0 0.0
        %1360 = vmatprep.subr.mxu0 0.0
        %1361 = vmatpush2.msra.mxu0 0.0
        %1362 = vmatprep.subr.mxu0 0.0
        %1363 = vmatpush2.msra.mxu0 0.0
        %1364 = vmatprep.subr.mxu0 0.0
        %1365 = vmatpush2.msra.mxu0 0.0
        %1366 = vmatprep.subr.mxu0 0.0
        %1367 = vmatpush2.msra.mxu0 0.0
        %1368 = vmatprep.subr.mxu0 0.0
        %1369 = vmatpush2.msra.mxu0 0.0
        %1370 = vmatprep.subr.mxu0 0.0
        %1371 = vmatpush2.msra.mxu0 0.0
        %1372 = vmatprep.subr.mxu0 0.0
        %1373 = vmatpush2.msra.mxu0 0.0
        %1374 = vmatprep.subr.mxu0 0.0
        %1375 = vmatpush2.msra.mxu0 0.0
        %1376 = vmatprep.subr.mxu0 0.0
        %1377 = vmatpush2.msra.mxu0 0.0
        %1378 = vmatprep.subr.mxu0 0.0
        %1379 = vmatpush2.msra.mxu0 0.0
        %1380 = vmatprep.subr.mxu0 0.0
        %1381 = vmatpush2.msra.mxu0 0.0
        %1382 = vmatprep.mubr.f32.mxu0 0.0
        %1383 = vmatmul.mubr.f32.gmra.mxu0 %v1177
        %v1384 = vpop.f32.mrf.mxu0
        %v1385 = vadd.f32 0.0, %v1384
        %v1386 = vpop.f32.mrf.mxu0
        %1387 = vmatprep.mubr.f32.mxu0 0.0
        %1388 = vmatmul.mubr.f32.gmra.mxu0 %v1178
        %v1389 = vpop.f32.mrf.mxu0
        %v1390 = vadd.f32 0.0, %v1389
        %v1391 = vpop.f32.mrf.mxu0
        %1392 = vmatprep.mubr.f32.mxu0 0.0
        %1393 = vmatmul.mubr.f32.gmra.mxu0 %v1179
        %v1394 = vpop.f32.mrf.mxu0
        %v1395 = vadd.f32 0.0, %v1394
        %v1396 = vpop.f32.mrf.mxu0
        %1397 = vmatprep.mubr.f32.mxu0 0.0
        %1398 = vmatmul.mubr.f32.gmra.mxu0 %v1180
        %v1399 = vpop.f32.mrf.mxu0
        %v1400 = vadd.f32 0.0, %v1399
        %v1401 = vpop.f32.mrf.mxu0
        %1402 = vdwg.mxu0
        %v1403 = vsub.s32 %v564, %v373
        %v1404 = vsub.s32 %v565, %v373
        %vm1405 = vcmp.eq.s32.totalorder %v1403, 1
        %vm1406 = vcmp.eq.s32.totalorder %v1404, 1
        %v1407 = vsub.s32 %v373, %v564
        %v1408 = vsub.s32 %v373, %v565
        %vm1409 = vcmp.eq.s32.totalorder %v1407, 1
        %vm1410 = vcmp.eq.s32.totalorder %v1408, 1
        %vm1411 = vcmp.ne.s32.totalorder %v370, 16
        %vm1412 = vcmp.ne.s32.totalorder %v371, 16
        %vm1413 = vcmp.ne.s32.totalorder %v564, 16
        %vm1414 = vcmp.ne.s32.totalorder %v565, 16
        %vm1415 = vmand %vm376, %vm1411
        %vm1416 = vmand %vm377, %vm1412
        %vm1417 = vmand %vm1405, %vm1413
        %vm1418 = vmand %vm1406, %vm1414
        %vm1419 = vcmp.ne.s32.totalorder %v373, 16
        %vm1420 = vmand %vm380, %vm1419
        %vm1421 = vmand %vm381, %vm1419
        %vm1422 = vmand %vm1409, %vm1419
        %vm1423 = vmand %vm1410, %vm1419
        %v1424 = vsel %vm1415, 1, 0
        %v1425 = vsel %vm1416, 1, 0
        %v1426 = vsel %vm1417, 1, 0
        %v1427 = vsel %vm1418, 1, 0
        %v1428 = vcvt.s32.f32 %v1424
        %v1429 = vcvt.s32.f32 %v1425
        %v1430 = vcvt.s32.f32 %v1426
        %v1431 = vcvt.s32.f32 %v1427
        %v1432 = vsel %vm1420, 1, 0
        %v1433 = vsel %vm1421, 1, 0
        %v1434 = vsel %vm1422, 1, 0
        %v1435 = vsel %vm1423, 1, 0
        %v1436 = vcvt.s32.f32 %v1432
        %v1437 = vcvt.s32.f32 %v1433
        %v1438 = vcvt.s32.f32 %v1434
        %v1439 = vcvt.s32.f32 %v1435
        %vm1440 = vcmask 261120
        %v1442 = vsel %vm1440, %v1428, 0
        %v1445 = vsel %vm1440, %v1429, 0
        %v1448 = vsel %vm1440, %v1430, 0
        %v1451 = vsel %vm1440, %v1431, 0
        %1453 = vmatprep.subr.mxu0 0.0
        %1454 = vmatpush1.msra.mxu0 0.0
        %1455 = vmatprep.subr.mxu0 0.0
        %1456 = vmatpush1.msra.mxu0 0.0
        %1457 = vmatprep.subr.mxu0 0.0
        %1458 = vmatpush1.msra.mxu0 0.0
        %1459 = vmatprep.subr.mxu0 0.0
        %1460 = vmatpush1.msra.mxu0 0.0
        %1461 = vmatprep.subr.mxu0 0.0
        %1462 = vmatpush1.msra.mxu0 0.0
        %1463 = vmatprep.subr.mxu0 0.0
        %1464 = vmatpush1.msra.mxu0 0.0
        %1465 = vmatprep.subr.mxu0 0.0
        %1466 = vmatpush1.msra.mxu0 0.0
        %1467 = vmatprep.subr.mxu0 0.0
        %1468 = vmatpush1.msra.mxu0 0.0
        %1469 = vmatprep.subr.mxu0 0.0
        %1470 = vmatpush1.msra.mxu0 0.0
        %1471 = vmatprep.subr.mxu0 0.0
        %1472 = vmatpush1.msra.mxu0 0.0
        %1473 = vmatprep.subr.mxu0 0.0
        %1474 = vmatpush1.msra.mxu0 0.0
        %1475 = vmatprep.subr.mxu0 0.0
        %1476 = vmatpush1.msra.mxu0 0.0
        %1477 = vmatprep.subr.mxu0 0.0
        %1478 = vmatpush1.msra.mxu0 %v1314
        %1479 = vmatprep.subr.mxu0 0.0
        %1480 = vmatpush1.msra.mxu0 %v1308
        %1481 = vmatprep.subr.mxu0 0.0
        %1482 = vmatpush1.msra.mxu0 %v1302
        %1483 = vmatprep.subr.mxu0 0.0
        %1484 = vmatpush1.msra.mxu0 %v1296
        %1485 = vmatprep.subr.mxu0 0.0
        %1486 = vmatpush2.msra.mxu0 0.0
        %1487 = vmatprep.subr.mxu0 0.0
        %1488 = vmatpush2.msra.mxu0 0.0
        %1489 = vmatprep.subr.mxu0 0.0
        %1490 = vmatpush2.msra.mxu0 0.0
        %1491 = vmatprep.subr.mxu0 0.0
        %1492 = vmatpush2.msra.mxu0 0.0
        %1493 = vmatprep.subr.mxu0 0.0
        %1494 = vmatpush2.msra.mxu0 0.0
        %1495 = vmatprep.subr.mxu0 0.0
        %1496 = vmatpush2.msra.mxu0 0.0
        %1497 = vmatprep.subr.mxu0 0.0
        %1498 = vmatpush2.msra.mxu0 0.0
        %1499 = vmatprep.subr.mxu0 0.0
        %1500 = vmatpush2.msra.mxu0 0.0
        %1501 = vmatprep.subr.mxu0 0.0
        %1502 = vmatpush2.msra.mxu0 0.0
        %1503 = vmatprep.subr.mxu0 0.0
        %1504 = vmatpush2.msra.mxu0 0.0
        %1505 = vmatprep.subr.mxu0 0.0
        %1506 = vmatpush2.msra.mxu0 0.0
        %1507 = vmatprep.subr.mxu0 0.0
        %1508 = vmatpush2.msra.mxu0 0.0
        %1509 = vmatprep.subr.mxu0 0.0
        %1510 = vmatpush2.msra.mxu0 0.0
        %1511 = vmatprep.subr.mxu0 0.0
        %1512 = vmatpush2.msra.mxu0 0.0
        %1513 = vmatprep.subr.mxu0 0.0
        %1514 = vmatpush2.msra.mxu0 0.0
        %1515 = vmatprep.subr.mxu0 0.0
        %1516 = vmatpush2.msra.mxu0 0.0
        %1517 = vmatprep.mubr.f32.mxu0 0.0
        %1518 = vmatmul.mubr.f32.gmra.mxu0 %v1442
        %v1519 = vpop.f32.mrf.mxu0
        %v1520 = vadd.f32 0.0, %v1519
        %v1521 = vpop.f32.mrf.mxu0
        %1522 = vmatprep.mubr.f32.mxu0 0.0
        %1523 = vmatmul.mubr.f32.gmra.mxu0 %v1445
        %v1524 = vpop.f32.mrf.mxu0
        %v1525 = vadd.f32 0.0, %v1524
        %v1526 = vpop.f32.mrf.mxu0
        %1527 = vmatprep.mubr.f32.mxu0 0.0
        %1528 = vmatmul.mubr.f32.gmra.mxu0 %v1448
        %v1529 = vpop.f32.mrf.mxu0
        %v1530 = vadd.f32 0.0, %v1529
        %v1531 = vpop.f32.mrf.mxu0
        %1532 = vmatprep.mubr.f32.mxu0 0.0
        %1533 = vmatmul.mubr.f32.gmra.mxu0 %v1451
        %v1534 = vpop.f32.mrf.mxu0
        %v1535 = vadd.f32 0.0, %v1534
        %v1536 = vpop.f32.mrf.mxu0
        %1537 = vdwg.mxu0
        %v1538 = vadd.f32 %v1298, %v1520
        %v1539 = vadd.f32 %v1304, %v1525
        %v1540 = vadd.f32 %v1310, %v1530
        %v1541 = vadd.f32 %v1316, %v1535
        %v1543 = vsel %vm1440, %v1436, 0
        %v1546 = vsel %vm1440, %v1437, 0
        %v1549 = vsel %vm1440, %v1438, 0
        %v1552 = vsel %vm1440, %v1439, 0
        %1554 = vmatprep.subr.mxu0 0.0
        %1555 = vmatpush1.msra.mxu0 0.0
        %1556 = vmatprep.subr.mxu0 0.0
        %1557 = vmatpush1.msra.mxu0 0.0
        %1558 = vmatprep.subr.mxu0 0.0
        %1559 = vmatpush1.msra.mxu0 0.0
        %1560 = vmatprep.subr.mxu0 0.0
        %1561 = vmatpush1.msra.mxu0 0.0
        %1562 = vmatprep.subr.mxu0 0.0
        %1563 = vmatpush1.msra.mxu0 0.0
        %1564 = vmatprep.subr.mxu0 0.0
        %1565 = vmatpush1.msra.mxu0 0.0
        %1566 = vmatprep.subr.mxu0 0.0
        %1567 = vmatpush1.msra.mxu0 0.0
        %1568 = vmatprep.subr.mxu0 0.0
        %1569 = vmatpush1.msra.mxu0 0.0
        %1570 = vmatprep.subr.mxu0 0.0
        %1571 = vmatpush1.msra.mxu0 0.0
        %1572 = vmatprep.subr.mxu0 0.0
        %1573 = vmatpush1.msra.mxu0 0.0
        %1574 = vmatprep.subr.mxu0 0.0
        %1575 = vmatpush1.msra.mxu0 0.0
        %1576 = vmatprep.subr.mxu0 0.0
        %1577 = vmatpush1.msra.mxu0 0.0
        %1578 = vmatprep.subr.mxu0 0.0
        %1579 = vmatpush1.msra.mxu0 %v1400
        %1580 = vmatprep.subr.mxu0 0.0
        %1581 = vmatpush1.msra.mxu0 %v1395
        %1582 = vmatprep.subr.mxu0 0.0
        %1583 = vmatpush1.msra.mxu0 %v1390
        %1584 = vmatprep.subr.mxu0 0.0
        %1585 = vmatpush1.msra.mxu0 %v1385
        %1586 = vmatprep.subr.mxu0 0.0
        %1587 = vmatpush2.msra.mxu0 0.0
        %1588 = vmatprep.subr.mxu0 0.0
        %1589 = vmatpush2.msra.mxu0 0.0
        %1590 = vmatprep.subr.mxu0 0.0
        %1591 = vmatpush2.msra.mxu0 0.0
        %1592 = vmatprep.subr.mxu0 0.0
        %1593 = vmatpush2.msra.mxu0 0.0
        %1594 = vmatprep.subr.mxu0 0.0
        %1595 = vmatpush2.msra.mxu0 0.0
        %1596 = vmatprep.subr.mxu0 0.0
        %1597 = vmatpush2.msra.mxu0 0.0
        %1598 = vmatprep.subr.mxu0 0.0
        %1599 = vmatpush2.msra.mxu0 0.0
        %1600 = vmatprep.subr.mxu0 0.0
        %1601 = vmatpush2.msra.mxu0 0.0
        %1602 = vmatprep.subr.mxu0 0.0
        %1603 = vmatpush2.msra.mxu0 0.0
        %1604 = vmatprep.subr.mxu0 0.0
        %1605 = vmatpush2.msra.mxu0 0.0
        %1606 = vmatprep.subr.mxu0 0.0
        %1607 = vmatpush2.msra.mxu0 0.0
        %1608 = vmatprep.subr.mxu0 0.0
        %1609 = vmatpush2.msra.mxu0 0.0
        %1610 = vmatprep.subr.mxu0 0.0
        %1611 = vmatpush2.msra.mxu0 0.0
        %1612 = vmatprep.subr.mxu0 0.0
        %1613 = vmatpush2.msra.mxu0 0.0
        %1614 = vmatprep.subr.mxu0 0.0
        %1615 = vmatpush2.msra.mxu0 0.0
        %1616 = vmatprep.subr.mxu0 0.0
        %1617 = vmatpush2.msra.mxu0 0.0
        %1618 = vmatprep.mubr.f32.mxu0 0.0
        %1619 = vmatmul.mubr.f32.gmra.mxu0 %v1543
        %v1620 = vpop.f32.mrf.mxu0
        %v1621 = vadd.f32 0.0, %v1620
        %v1622 = vpop.f32.mrf.mxu0
        %1623 = vmatprep.mubr.f32.mxu0 0.0
        %1624 = vmatmul.mubr.f32.gmra.mxu0 %v1546
        %v1625 = vpop.f32.mrf.mxu0
        %v1626 = vadd.f32 0.0, %v1625
        %v1627 = vpop.f32.mrf.mxu0
        %1628 = vmatprep.mubr.f32.mxu0 0.0
        %1629 = vmatmul.mubr.f32.gmra.mxu0 %v1549
        %v1630 = vpop.f32.mrf.mxu0
        %v1631 = vadd.f32 0.0, %v1630
        %v1632 = vpop.f32.mrf.mxu0
        %1633 = vmatprep.mubr.f32.mxu0 0.0
        %1634 = vmatmul.mubr.f32.gmra.mxu0 %v1552
        %v1635 = vpop.f32.mrf.mxu0
        %v1636 = vadd.f32 0.0, %v1635
        %v1637 = vpop.f32.mrf.mxu0
        %1638 = vdwg.mxu0
        %v1639 = vadd.f32 %v1538, %v1621
        %v1640 = vadd.f32 %v1539, %v1626
        %v1641 = vadd.f32 %v1540, %v1631
        %v1642 = vadd.f32 %v1541, %v1636
        %v1643 = vld [vmem:[%s3 + $0x2] sm:$0x1]
        %v1644 = vld [vmem:[%s3 + $0x3] sm:$0x1]
        %v1645 = vadd.f32 %v1639, %v1640
        %v1646 = vadd.f32 %v1645, %v1641
        %v1647 = vadd.f32 %v1646, %v1642
        %v1648 = vrot.slane %v1647, 4
        %v1649 = vadd.f32 %v1647, %v1648
        %v1650 = vrot.slane %v1649, 2
        %v1651 = vadd.f32 %v1649, %v1650
        %v1652 = vrot.slane %v1651, 1
        %v1653 = vadd.f32 %v1651, %v1652
        %1654 = vmatprep.subr.mxu0 0.0
        %1655 = vmatpush1.msra.mxu0 %v817
        %1656 = vmatprep.subr.mxu0 0.0
        %1657 = vmatpush1.msra.mxu0 %v816
        %1658 = vmatprep.subr.mxu0 0.0
        %1659 = vmatpush1.msra.mxu0 %v815
        %1660 = vmatprep.subr.mxu0 0.0
        %1661 = vmatpush1.msra.mxu0 %v814
        %1662 = vmatprep.subr.mxu0 0.0
        %1663 = vmatpush1.msra.mxu0 %v813
        %1664 = vmatprep.subr.mxu0 0.0
        %1665 = vmatpush1.msra.mxu0 %v812
        %1666 = vmatprep.subr.mxu0 0.0
        %1667 = vmatpush1.msra.mxu0 %v811
        %1668 = vmatprep.subr.mxu0 0.0
        %1669 = vmatpush1.msra.mxu0 %v810
        %1670 = vmatprep.subr.mxu0 0.0
        %1671 = vmatpush1.msra.mxu0 %v809
        %1672 = vmatprep.subr.mxu0 0.0
        %1673 = vmatpush1.msra.mxu0 %v808
        %1674 = vmatprep.subr.mxu0 0.0
        %1675 = vmatpush1.msra.mxu0 %v807
        %1676 = vmatprep.subr.mxu0 0.0
        %1677 = vmatpush1.msra.mxu0 %v806
        %1678 = vmatprep.subr.mxu0 0.0
        %1679 = vmatpush1.msra.mxu0 %v805
        %1680 = vmatprep.subr.mxu0 0.0
        %1681 = vmatpush1.msra.mxu0 %v804
        %1682 = vmatprep.subr.mxu0 0.0
        %1683 = vmatpush1.msra.mxu0 %v803
        %1684 = vmatprep.subr.mxu0 0.0
        %1685 = vmatpush1.msra.mxu0 %v802
        %1686 = vmatprep.subr.mxu0 0.0
        %1687 = vmatpush2.msra.mxu0 0.0
        %1688 = vmatprep.subr.mxu0 0.0
        %1689 = vmatpush2.msra.mxu0 0.0
        %1690 = vmatprep.subr.mxu0 0.0
        %1691 = vmatpush2.msra.mxu0 0.0
        %1692 = vmatprep.subr.mxu0 0.0
        %1693 = vmatpush2.msra.mxu0 0.0
        %1694 = vmatprep.subr.mxu0 0.0
        %1695 = vmatpush2.msra.mxu0 0.0
        %1696 = vmatprep.subr.mxu0 0.0
        %1697 = vmatpush2.msra.mxu0 0.0
        %1698 = vmatprep.subr.mxu0 0.0
        %1699 = vmatpush2.msra.mxu0 0.0
        %1700 = vmatprep.subr.mxu0 0.0
        %1701 = vmatpush2.msra.mxu0 0.0
        %1702 = vmatprep.subr.mxu0 0.0
        %1703 = vmatpush2.msra.mxu0 0.0
        %1704 = vmatprep.subr.mxu0 0.0
        %1705 = vmatpush2.msra.mxu0 0.0
        %1706 = vmatprep.subr.mxu0 0.0
        %1707 = vmatpush2.msra.mxu0 0.0
        %1708 = vmatprep.subr.mxu0 0.0
        %1709 = vmatpush2.msra.mxu0 0.0
        %1710 = vmatprep.subr.mxu0 0.0
        %1711 = vmatpush2.msra.mxu0 0.0
        %1712 = vmatprep.subr.mxu0 0.0
        %1713 = vmatpush2.msra.mxu0 0.0
        %1714 = vmatprep.subr.mxu0 0.0
        %1715 = vmatpush2.msra.mxu0 0.0
        %1716 = vmatprep.subr.mxu0 0.0
        %1717 = vmatpush2.msra.mxu0 0.0
        %1718 = vmatprep.mubr.f32.mxu0 0.0
        %1719 = vmatmul.mubr.f32.gmra.mxu0 %v1653
        %v1720 = vpop.f32.mrf.mxu0
        %v1721 = vadd.f32 0.0, %v1720
        %v1722 = vpop.f32.mrf.mxu0
        %1723 = vdwg.mxu0
        %v1724 = vmul.f32 %v1721, 0.001953125
        %v1726 = vsel %vm919, %v1724, 0
        %1728 = vmatprep.subr.mxu0 0.0
        %1729 = vmatpush1.msra.mxu0 0.0
        %1730 = vmatprep.subr.mxu0 0.0
        %1731 = vmatpush1.msra.mxu0 0.0
        %1732 = vmatprep.subr.mxu0 0.0
        %1733 = vmatpush1.msra.mxu0 0.0
        %1734 = vmatprep.subr.mxu0 0.0
        %1735 = vmatpush1.msra.mxu0 0.0
        %1736 = vmatprep.subr.mxu0 0.0
        %1737 = vmatpush1.msra.mxu0 0.0
        %1738 = vmatprep.subr.mxu0 0.0
        %1739 = vmatpush1.msra.mxu0 0.0
        %1740 = vmatprep.subr.mxu0 0.0
        %1741 = vmatpush1.msra.mxu0 0.0
        %1742 = vmatprep.subr.mxu0 0.0
        %1743 = vmatpush1.msra.mxu0 0.0
        %1744 = vmatprep.subr.mxu0 0.0
        %1745 = vmatpush1.msra.mxu0 0.0
        %1746 = vmatprep.subr.mxu0 0.0
        %1747 = vmatpush1.msra.mxu0 0.0
        %1748 = vmatprep.subr.mxu0 0.0
        %1749 = vmatpush1.msra.mxu0 0.0
        %1750 = vmatprep.subr.mxu0 0.0
        %1751 = vmatpush1.msra.mxu0 0.0
        %1752 = vmatprep.subr.mxu0 0.0
        %1753 = vmatpush1.msra.mxu0 0.0
        %1754 = vmatprep.subr.mxu0 0.0
        %1755 = vmatpush1.msra.mxu0 0.0
        %1756 = vmatprep.subr.mxu0 0.0
        %1757 = vmatpush1.msra.mxu0 0.0
        %1758 = vmatprep.subr.mxu0 0.0
        %1759 = vmatpush1.msra.mxu0 %v832
        %1760 = vmatprep.subr.mxu0 0.0
        %1761 = vmatpush2.msra.mxu0 0.0
        %1762 = vmatprep.subr.mxu0 0.0
        %1763 = vmatpush2.msra.mxu0 0.0
        %1764 = vmatprep.subr.mxu0 0.0
        %1765 = vmatpush2.msra.mxu0 0.0
        %1766 = vmatprep.subr.mxu0 0.0
        %1767 = vmatpush2.msra.mxu0 0.0
        %1768 = vmatprep.subr.mxu0 0.0
        %1769 = vmatpush2.msra.mxu0 0.0
        %1770 = vmatprep.subr.mxu0 0.0
        %1771 = vmatpush2.msra.mxu0 0.0
        %1772 = vmatprep.subr.mxu0 0.0
        %1773 = vmatpush2.msra.mxu0 0.0
        %1774 = vmatprep.subr.mxu0 0.0
        %1775 = vmatpush2.msra.mxu0 0.0
        %1776 = vmatprep.subr.mxu0 0.0
        %1777 = vmatpush2.msra.mxu0 0.0
        %1778 = vmatprep.subr.mxu0 0.0
        %1779 = vmatpush2.msra.mxu0 0.0
        %1780 = vmatprep.subr.mxu0 0.0
        %1781 = vmatpush2.msra.mxu0 0.0
        %1782 = vmatprep.subr.mxu0 0.0
        %1783 = vmatpush2.msra.mxu0 0.0
        %1784 = vmatprep.subr.mxu0 0.0
        %1785 = vmatpush2.msra.mxu0 0.0
        %1786 = vmatprep.subr.mxu0 0.0
        %1787 = vmatpush2.msra.mxu0 0.0
        %1788 = vmatprep.subr.mxu0 0.0
        %1789 = vmatpush2.msra.mxu0 0.0
        %1790 = vmatprep.subr.mxu0 0.0
        %1791 = vmatpush2.msra.mxu0 0.0
        %1792 = vmatprep.mubr.f32.mxu0 0.0
        %1793 = vmatmul.mubr.f32.gmra.mxu0 %v1726
        %v1794 = vpop.f32.mrf.mxu0
        %v1795 = vadd.f32 0.0, %v1794
        %v1796 = vpop.f32.mrf.mxu0
        %1797 = vdwg.mxu0
        %v1798 = vlaneseq
        %v1799 = vshrl.u32 %v1798, 7
        %v1800 = vsub.s32 0, %v1799
        %v1801 = vrot.slane %v1795, %v1800
        %v1802 = vsub.f32 %v1639, %v1801
        %v1803 = vsub.f32 %v1640, %v1801
        %v1804 = vsub.f32 %v1641, %v1801
        %v1805 = vsub.f32 %v1642, %v1801
        %v1806 = vmul.f32 %v1802, %v1802
        %v1807 = vmul.f32 %v1803, %v1803
        %v1808 = vmul.f32 %v1804, %v1804
        %v1809 = vmul.f32 %v1805, %v1805
        %v1810 = vadd.f32 %v1806, %v1807
        %v1811 = vadd.f32 %v1810, %v1808
        %v1812 = vadd.f32 %v1811, %v1809
        %v1813 = vrot.slane %v1812, 4
        %v1814 = vadd.f32 %v1812, %v1813
        %v1815 = vrot.slane %v1814, 2
        %v1816 = vadd.f32 %v1814, %v1815
        %v1817 = vrot.slane %v1816, 1
        %v1818 = vadd.f32 %v1816, %v1817
        %1819 = vmatprep.subr.mxu0 0.0
        %1820 = vmatpush1.msra.mxu0 %v817
        %1821 = vmatprep.subr.mxu0 0.0
        %1822 = vmatpush1.msra.mxu0 %v816
        %1823 = vmatprep.subr.mxu0 0.0
        %1824 = vmatpush1.msra.mxu0 %v815
        %1825 = vmatprep.subr.mxu0 0.0
        %1826 = vmatpush1.msra.mxu0 %v814
        %1827 = vmatprep.subr.mxu0 0.0
        %1828 = vmatpush1.msra.mxu0 %v813
        %1829 = vmatprep.subr.mxu0 0.0
        %1830 = vmatpush1.msra.mxu0 %v812
        %1831 = vmatprep.subr.mxu0 0.0
        %1832 = vmatpush1.msra.mxu0 %v811
        %1833 = vmatprep.subr.mxu0 0.0
        %1834 = vmatpush1.msra.mxu0 %v810
        %1835 = vmatprep.subr.mxu0 0.0
        %1836 = vmatpush1.msra.mxu0 %v809
        %1837 = vmatprep.subr.mxu0 0.0
        %1838 = vmatpush1.msra.mxu0 %v808
        %1839 = vmatprep.subr.mxu0 0.0
        %1840 = vmatpush1.msra.mxu0 %v807
        %1841 = vmatprep.subr.mxu0 0.0
        %1842 = vmatpush1.msra.mxu0 %v806
        %1843 = vmatprep.subr.mxu0 0.0
        %1844 = vmatpush1.msra.mxu0 %v805
        %1845 = vmatprep.subr.mxu0 0.0
        %1846 = vmatpush1.msra.mxu0 %v804
        %1847 = vmatprep.subr.mxu0 0.0
        %1848 = vmatpush1.msra.mxu0 %v803
        %1849 = vmatprep.subr.mxu0 0.0
        %1850 = vmatpush1.msra.mxu0 %v802
        %1851 = vmatprep.subr.mxu0 0.0
        %1852 = vmatpush2.msra.mxu0 0.0
        %1853 = vmatprep.subr.mxu0 0.0
        %1854 = vmatpush2.msra.mxu0 0.0
        %1855 = vmatprep.subr.mxu0 0.0
        %1856 = vmatpush2.msra.mxu0 0.0
        %1857 = vmatprep.subr.mxu0 0.0
        %1858 = vmatpush2.msra.mxu0 0.0
        %1859 = vmatprep.subr.mxu0 0.0
        %1860 = vmatpush2.msra.mxu0 0.0
        %1861 = vmatprep.subr.mxu0 0.0
        %1862 = vmatpush2.msra.mxu0 0.0
        %1863 = vmatprep.subr.mxu0 0.0
        %1864 = vmatpush2.msra.mxu0 0.0
        %1865 = vmatprep.subr.mxu0 0.0
        %1866 = vmatpush2.msra.mxu0 0.0
        %1867 = vmatprep.subr.mxu0 0.0
        %1868 = vmatpush2.msra.mxu0 0.0
        %1869 = vmatprep.subr.mxu0 0.0
        %1870 = vmatpush2.msra.mxu0 0.0
        %1871 = vmatprep.subr.mxu0 0.0
        %1872 = vmatpush2.msra.mxu0 0.0
        %1873 = vmatprep.subr.mxu0 0.0
        %1874 = vmatpush2.msra.mxu0 0.0
        %1875 = vmatprep.subr.mxu0 0.0
        %1876 = vmatpush2.msra.mxu0 0.0
        %1877 = vmatprep.subr.mxu0 0.0
        %1878 = vmatpush2.msra.mxu0 0.0
        %1879 = vmatprep.subr.mxu0 0.0
        %1880 = vmatpush2.msra.mxu0 0.0
        %1881 = vmatprep.subr.mxu0 0.0
        %1882 = vmatpush2.msra.mxu0 0.0
        %1883 = vmatprep.mubr.f32.mxu0 0.0
        %1884 = vmatmul.mubr.f32.gmra.mxu0 %v1818
        %v1885 = vpop.f32.mrf.mxu0
        %v1886 = vadd.f32 0.0, %v1885
        %v1887 = vpop.f32.mrf.mxu0
        %1888 = vdwg.mxu0
        %v1889 = vmul.f32 %v1886, 0.001953125
        %v1890 = vadd.f32 %v1889, 1e-05
        %v1891 = vrsqrt.pop %v1890
        %v1893 = vsel %vm919, %v1891, 0
        %1895 = vmatprep.subr.mxu0 0.0
        %1896 = vmatpush1.msra.mxu0 0.0
        %1897 = vmatprep.subr.mxu0 0.0
        %1898 = vmatpush1.msra.mxu0 0.0
        %1899 = vmatprep.subr.mxu0 0.0
        %1900 = vmatpush1.msra.mxu0 0.0
        %1901 = vmatprep.subr.mxu0 0.0
        %1902 = vmatpush1.msra.mxu0 0.0
        %1903 = vmatprep.subr.mxu0 0.0
        %1904 = vmatpush1.msra.mxu0 0.0
        %1905 = vmatprep.subr.mxu0 0.0
        %1906 = vmatpush1.msra.mxu0 0.0
        %1907 = vmatprep.subr.mxu0 0.0
        %1908 = vmatpush1.msra.mxu0 0.0
        %1909 = vmatprep.subr.mxu0 0.0
        %1910 = vmatpush1.msra.mxu0 0.0
        %1911 = vmatprep.subr.mxu0 0.0
        %1912 = vmatpush1.msra.mxu0 0.0
        %1913 = vmatprep.subr.mxu0 0.0
        %1914 = vmatpush1.msra.mxu0 0.0
        %1915 = vmatprep.subr.mxu0 0.0
        %1916 = vmatpush1.msra.mxu0 0.0
        %1917 = vmatprep.subr.mxu0 0.0
        %1918 = vmatpush1.msra.mxu0 0.0
        %1919 = vmatprep.subr.mxu0 0.0
        %1920 = vmatpush1.msra.mxu0 0.0
        %1921 = vmatprep.subr.mxu0 0.0
        %1922 = vmatpush1.msra.mxu0 0.0
        %1923 = vmatprep.subr.mxu0 0.0
        %1924 = vmatpush1.msra.mxu0 0.0
        %1925 = vmatprep.subr.mxu0 0.0
        %1926 = vmatpush1.msra.mxu0 %v832
        %1927 = vmatprep.subr.mxu0 0.0
        %1928 = vmatpush2.msra.mxu0 0.0
        %1929 = vmatprep.subr.mxu0 0.0
        %1930 = vmatpush2.msra.mxu0 0.0
        %1931 = vmatprep.subr.mxu0 0.0
        %1932 = vmatpush2.msra.mxu0 0.0
        %1933 = vmatprep.subr.mxu0 0.0
        %1934 = vmatpush2.msra.mxu0 0.0
        %1935 = vmatprep.subr.mxu0 0.0
        %1936 = vmatpush2.msra.mxu0 0.0
        %1937 = vmatprep.subr.mxu0 0.0
        %1938 = vmatpush2.msra.mxu0 0.0
        %1939 = vmatprep.subr.mxu0 0.0
        %1940 = vmatpush2.msra.mxu0 0.0
        %1941 = vmatprep.subr.mxu0 0.0
        %1942 = vmatpush2.msra.mxu0 0.0
        %1943 = vmatprep.subr.mxu0 0.0
        %1944 = vmatpush2.msra.mxu0 0.0
        %1945 = vmatprep.subr.mxu0 0.0
        %1946 = vmatpush2.msra.mxu0 0.0
        %1947 = vmatprep.subr.mxu0 0.0
        %1948 = vmatpush2.msra.mxu0 0.0
        %1949 = vmatprep.subr.mxu0 0.0
        %1950 = vmatpush2.msra.mxu0 0.0
        %1951 = vmatprep.subr.mxu0 0.0
        %1952 = vmatpush2.msra.mxu0 0.0
        %1953 = vmatprep.subr.mxu0 0.0
        %1954 = vmatpush2.msra.mxu0 0.0
        %1955 = vmatprep.subr.mxu0 0.0
        %1956 = vmatpush2.msra.mxu0 0.0
        %1957 = vmatprep.subr.mxu0 0.0
        %1958 = vmatpush2.msra.mxu0 0.0
        %1959 = vmatprep.mubr.f32.mxu0 0.0
        %1960 = vmatmul.mubr.f32.gmra.mxu0 %v1893
        %v1961 = vpop.f32.mrf.mxu0
        %v1962 = vadd.f32 0.0, %v1961
        %v1963 = vpop.f32.mrf.mxu0
        %1964 = vdwg.mxu0
        %v1965 = vmul.f32 %v1962, %v1643
        %v1966 = vlaneseq
        %v1967 = vshrl.u32 %v1966, 7
        %v1968 = vsub.s32 0, %v1967
        %v1969 = vrot.slane %v1965, %v1968
        %v1970 = vmul.f32 %v1802, %v1969
        %v1971 = vmul.f32 %v1803, %v1969
        %v1972 = vmul.f32 %v1804, %v1969
        %v1973 = vmul.f32 %v1805, %v1969
        %v1974 = vlaneseq
        %v1975 = vshrl.u32 %v1974, 7
        %v1976 = vsub.s32 0, %v1975
        %v1977 = vrot.slane %v1644, %v1976
        %v1978 = vadd.f32 %v1970, %v1977
        %v1979 = vadd.f32 %v1971, %v1977
        %v1980 = vadd.f32 %v1972, %v1977
        %v1981 = vadd.f32 %v1973, %v1977
        %v1982 = vmax.f32 %v1978, 0.0
        %v1983 = vmax.f32 %v1979, 0.0
        %v1984 = vmax.f32 %v1980, 0.0
        %v1985 = vmax.f32 %v1981, 0.0
        %1986 = vst [vmem:[%s4] sm:$0xff] %v1982
        %1987 = vst [vmem:[%s4 + $0x8] sm:$0xff] %v1983
        %1988 = vst [vmem:[%s4 + $0x10] sm:$0xff] %v1984
        %1989 = vst [vmem:[%s4 + $0x18] sm:$0xff] %v1985
      $region40: #{local_feature_enhancement.1} parent=35 // pred_fallthru
        _
      // Predicated region
      $region41: #{local_feature_enhancement.1} parent=35 // pred_check
        %p1990 = pneg %p117
      $region42: #{local_feature_enhancement.1} parent=35 // pred_check_branch
        %1992 = sbr.rel (%p1990) target = $region44
      $region43: #{local_feature_enhancement.1} parent=35 // pred_region
        _
      $region44: #{local_feature_enhancement.1} parent=35 // pred_fallthru
        _
      // Predicated region
      $region45: #{local_feature_enhancement.1} parent=35 // pred_check
        %p1993 = pneg %p117
      $region46: #{local_feature_enhancement.1} parent=35 // pred_check_branch
        %1995 = sbr.rel (%p1993) target = $region48
      $region47: #{local_feature_enhancement.1} parent=35 // pred_region
        _
      $region48: #{local_feature_enhancement.1} parent=35 // pred_fallthru
        _
    $region36: #{local_feature_enhancement.1} parent=5 // pred_fallthru
      _
    %p1996 = scmp.le.s32.totalorder 2, %s10
    // Predicated region
    $region49: #{local_feature_enhancement.1} parent=5 // pred_check
      %p1997 = pneg %p1996
    $region50: #{local_feature_enhancement.1} parent=5 // pred_check_branch
      %1999 = sbr.rel (%p1997) target = $region52
    $region51: #{local_feature_enhancement.1} parent=5 // pred_region
      %s2000 = ssub.s32 %s10, 2
    $region52: #{local_feature_enhancement.1} parent=5 // pred_fallthru
      _
  $region6: #{local_feature_enhancement.1} parent=0 // loop_footer
    %s14 = sadd.s32 1, %s10
  $region7: #{local_feature_enhancement.1} parent=0 // loop_footer_branch
    %9 = sbr.rel target = $region3
  $region8: #{local_feature_enhancement.1} parent=0 // loop_exit
    _

</llo_original>
